<compile_context>
chip_gen: v5e
topology: v5e:2x2
jax: 0.10.0
libtpu: 0.0.40
codegen_flags: <defaults>
</compile_context>

<pallas_src>
import jax
import jax.numpy as jnp
from jax.experimental import pallas as pl
from jax.experimental.pallas import tpu as pltpu

HIDDEN = 400               # fixed by the PyTorch module
NEG_SLOPE = 0.01           # nn.LeakyReLU() default negative_slope
LANE = 128                 # TPU lane width
SUBLANE = 8                # f32 sublanes per vreg
MAX_BATCH_TILE = 1024      # amortizes ~0.35 us/step grid overhead; ~8-10 MiB working set
MIN_SPLIT_ROWS = 512       # batches >= this get >= 2 grid steps (v7x: feed both TCs)
VMEM_LIMIT_BYTES = 32 * 1024 * 1024   # explicit scoped-VMEM limit (v5e default is 16 MiB)


def _round_up(x, m):
    return (x + m - 1) // m * m


def _cdiv(a, b):
    return -(-a // b)


def _leaky_relu(v):
    return jnp.where(v > 0, v, NEG_SLOPE * v)


def dqn_kernel(x_ref,
               w1_ref, b1_ref,
               w2_ref, b2_ref,
               w3_ref, b3_ref,
               w4_ref, b4_ref,
               o_ref):
    # One batch tile per grid step; all 4 layers fused. Weights are bf16 and
    # VMEM-resident (single-buffered); accumulation is f32 on the MXU,
    # LeakyReLU on the VPU.
    h = jnp.dot(x_ref[...], w1_ref[...],
                preferred_element_type=jnp.float32) + b1_ref[...]
    h = _leaky_relu(h).astype(jnp.bfloat16)
    h = jnp.dot(h, w2_ref[...],
                preferred_element_type=jnp.float32) + b2_ref[...]
    h = _leaky_relu(h).astype(jnp.bfloat16)
    h = jnp.dot(h, w3_ref[...],
                preferred_element_type=jnp.float32) + b3_ref[...]
    h = _leaky_relu(h).astype(jnp.bfloat16)
    out = jnp.dot(h, w4_ref[...],
                  preferred_element_type=jnp.float32) + b4_ref[...]
    o_ref[...] = out


def _prepare_params(params, in_pad, hid_pad, out_pad):
    """Zero-pad weights/biases to lane-aligned shapes; cast weights to bf16."""
    def pad2(a, rows, cols):
        return jnp.pad(a, ((0, rows - a.shape[0]), (0, cols - a.shape[1])))

    shapes = {
        "w1": (in_pad, hid_pad), "b1": (1, hid_pad),
        "w2": (hid_pad, hid_pad), "b2": (1, hid_pad),
        "w3": (hid_pad, hid_pad), "b3": (1, hid_pad),
        "w4": (hid_pad, out_pad), "b4": (1, out_pad),
    }
    prepared = {}
    for name, (r, c) in shapes.items():
        a = pad2(params[name], r, c)
        if name.startswith("w"):
            prepared[name] = a.astype(jnp.bfloat16)
        else:
            prepared[name] = a.astype(jnp.float32)   # biases added to f32 acc
    return prepared


def _choose_batch_tiling(B):
    """Pick (tile_rows, n_tiles) so padding is small and v7x's 2 TCs both work."""
    b8 = _round_up(B, SUBLANE)
    n_tiles = max(1, _cdiv(b8, MAX_BATCH_TILE))
    if n_tiles == 1 and b8 >= MIN_SPLIT_ROWS:
        n_tiles = 2                       # give the 'parallel' axis >= 2 steps
    tb = _round_up(_cdiv(b8, n_tiles), SUBLANE)
    return tb, n_tiles


def dqn_forward(x, params):
    """x: (B, ...) -> flattened to (B, in_dim). params: see init_params."""
    B = x.shape[0]
    x2 = x.reshape(B, -1)                       # torch.flatten(x, 1)
    in_dim = x2.shape[1]
    hid = params["w1"].shape[1]
    out_dim = params["w4"].shape[1]

    in_pad = _round_up(in_dim, LANE)
    hid_pad = _round_up(hid, LANE)              # 400 -> 512 (padded lanes stay 0)
    out_pad = _round_up(out_dim, LANE)          # lane-dense output stores
    tb, n_tiles = _choose_batch_tiling(B)
    b_pad = tb * n_tiles                        # padding <= ~n_tiles*SUBLANE rows

    # Cast first (halves the pad/copy bytes), then zero-pad batch & feature dims.
    # (At large in_dim this pad/cast could be folded into the kernel itself.)
    xp = jnp.pad(x2.astype(jnp.bfloat16),
                 ((0, b_pad - B), (0, in_pad - in_dim)))
    p = _prepare_params(params, in_pad, hid_pad, out_pad)

    grid = (n_tiles,)

    def resident(shape):
        # Constant block index -> tile is loaded once and stays in VMEM across
        # the whole grid; Buffered(1) disables pointless double-buffering.
        return pl.BlockSpec(shape, lambda i: (0, 0), pipeline_mode=pl.Buffered(1))

    in_specs = [
        pl.BlockSpec((tb, in_pad), lambda i: (i, 0)),     # x: tiled over batch
        resident((in_pad, hid_pad)), resident((1, hid_pad)),
        resident((hid_pad, hid_pad)), resident((1, hid_pad)),
        resident((hid_pad, hid_pad)), resident((1, hid_pad)),
        resident((hid_pad, out_pad)), resident((1, out_pad)),
    ]
    out_specs = pl.BlockSpec((tb, out_pad), lambda i: (i, 0))

    flops = 2 * b_pad * (in_pad * hid_pad
                         + 2 * hid_pad * hid_pad
                         + hid_pad * out_pad)
    bytes_accessed = (xp.size * xp.dtype.itemsize
                      + sum(v.size * v.dtype.itemsize for v in p.values())
                      + b_pad * out_pad * 4)

    out = pl.pallas_call(
        dqn_kernel,
        out_shape=jax.ShapeDtypeStruct((b_pad, out_pad), jnp.float32),
        grid=grid,
        in_specs=in_specs,
        out_specs=out_specs,
        compiler_params=pltpu.CompilerParams(
            dimension_semantics=("parallel",),
            vmem_limit_bytes=VMEM_LIMIT_BYTES),
        cost_estimate=pl.CostEstimate(
            flops=flops, transcendentals=0, bytes_accessed=bytes_accessed),
    )(xp,
      p["w1"], p["b1"],
      p["w2"], p["b2"],
      p["w3"], p["b3"],
      p["w4"], p["b4"])

    return out[:B, :out_dim]


def init_params(key, in_dim, out_dim):
    """f32 params mimicking PyTorch nn.Linear default init (U(-k, k), k=1/sqrt(fan_in))."""
    dims = [(in_dim, HIDDEN), (HIDDEN, HIDDEN), (HIDDEN, HIDDEN), (HIDDEN, out_dim)]
    params = {}
    for i, (fan_in, fan_out) in enumerate(dims, start=1):
        key, kw, kb = jax.random.split(key, 3)
        bound = 1.0 / jnp.sqrt(jnp.float32(fan_in))
        params[f"w{i}"] = jax.random.uniform(
            kw, (fan_in, fan_out), jnp.float32, -bound, bound)
        params[f"b{i}"] = jax.random.uniform(
            kb, (1, fan_out), jnp.float32, -bound, bound)
    return params


def dqn_reference(x, params):
    """Plain-JAX f32 reference for correctness checking."""
    h = x.reshape(x.shape[0], -1)
    for i in (1, 2, 3):
        h = _leaky_relu(h @ params[f"w{i}"] + params[f"b{i}"])
    return h @ params["w4"] + params["b4"]


if __name__ == "__main__":
    key = jax.random.PRNGKey(0)
    kp, kx1, kx2 = jax.random.split(key, 3)

    in_dim, out_dim = 16, 8
    params = init_params(kp, in_dim, out_dim)

    # Small deterministic case (single grid step).
    x_small = jax.random.normal(kx1, (2, in_dim), jnp.float32)
    out_small = jax.block_until_ready(dqn_forward(x_small, params))
    ref_small = dqn_reference(x_small, params)
    assert out_small.shape == (2, out_dim)
    assert jnp.allclose(out_small, ref_small, atol=5e-2, rtol=5e-2), \
        "mismatch vs JAX reference (small batch)"

    # Larger batch exercising the multi-tile / padded-batch path (grid of 2).
    x_big = jax.random.normal(kx2, (520, in_dim), jnp.float32)
    out_big = jax.block_until_ready(dqn_forward(x_big, params))
    ref_big = dqn_reference(x_big, params)
    assert out_big.shape == (520, out_dim)
    assert jnp.allclose(out_big, ref_big, atol=5e-2, rtol=5e-2), \
        "mismatch vs JAX reference (large batch)"

    print("KERNEL_OK")
</pallas_src>

<mosaic_0001>
module attributes {stable_mosaic.version = 11 : i64} {
  func.func @dqn_kernel(%arg0: i32, %arg1: memref<8x128xbf16, #tpu.memory_space<vmem>>, %arg2: memref<128x512xbf16, #tpu.memory_space<vmem>>, %arg3: memref<1x512xf32, #tpu.memory_space<vmem>>, %arg4: memref<512x512xbf16, #tpu.memory_space<vmem>>, %arg5: memref<1x512xf32, #tpu.memory_space<vmem>>, %arg6: memref<512x512xbf16, #tpu.memory_space<vmem>>, %arg7: memref<1x512xf32, #tpu.memory_space<vmem>>, %arg8: memref<512x128xbf16, #tpu.memory_space<vmem>>, %arg9: memref<1x128xf32, #tpu.memory_space<vmem>>, %arg10: memref<8x128xf32, #tpu.memory_space<vmem>>) attributes {dimension_semantics = [#tpu.dimension_semantics<parallel>], iteration_bounds = array<i64: 1>, scalar_prefetch = 0 : i64, scratch_operands = 0 : i64, tpu.core_type = #tpu.core_type<tc>, window_params = [{transform_indices = @transform_0, window_bounds = array<i64: 8, 128>}, {pipeline_mode = #tpu.pipeline_mode<synchronous>, transform_indices = @transform_1, window_bounds = array<i64: 128, 512>}, {pipeline_mode = #tpu.pipeline_mode<synchronous>, transform_indices = @transform_2, window_bounds = array<i64: 1, 512>}, {pipeline_mode = #tpu.pipeline_mode<synchronous>, transform_indices = @transform_3, window_bounds = array<i64: 512, 512>}, {pipeline_mode = #tpu.pipeline_mode<synchronous>, transform_indices = @transform_4, window_bounds = array<i64: 1, 512>}, {pipeline_mode = #tpu.pipeline_mode<synchronous>, transform_indices = @transform_5, window_bounds = array<i64: 512, 512>}, {pipeline_mode = #tpu.pipeline_mode<synchronous>, transform_indices = @transform_6, window_bounds = array<i64: 1, 512>}, {pipeline_mode = #tpu.pipeline_mode<synchronous>, transform_indices = @transform_7, window_bounds = array<i64: 512, 128>}, {pipeline_mode = #tpu.pipeline_mode<synchronous>, transform_indices = @transform_8, window_bounds = array<i64: 1, 128>}, {transform_indices = @transform_9, window_bounds = array<i64: 8, 128>}]} {
    %c0 = arith.constant 0 : index
    %c0_0 = arith.constant 0 : index
    %0 = vector.load %arg1[%c0, %c0_0] : memref<8x128xbf16, #tpu.memory_space<vmem>>, vector<8x128xbf16>
    %c0_1 = arith.constant 0 : index
    %c0_2 = arith.constant 0 : index
    %1 = vector.load %arg2[%c0_1, %c0_2] : memref<128x512xbf16, #tpu.memory_space<vmem>>, vector<128x512xbf16>
    %cst = arith.constant dense<0.000000e+00> : vector<8x512xf32>
    %2 = tpu.matmul %0, %1, %cst {dimension_numbers = #tpu.dot_dimension_numbers<[1], [0], [0], [1], [0, 0, 1, 1], [], []>} : vector<8x128xbf16>, vector<128x512xbf16>, vector<8x512xf32> -> vector<8x512xf32>
    %c0_3 = arith.constant 0 : index
    %c0_4 = arith.constant 0 : index
    %3 = vector.load %arg3[%c0_3, %c0_4] : memref<1x512xf32, #tpu.memory_space<vmem>>, vector<1x512xf32>
    %4 = vector.broadcast %3 : vector<1x512xf32> to vector<8x512xf32>
    %5 = arith.addf %2, %4 : vector<8x512xf32>
    %cst_5 = arith.constant 0.000000e+00 : f32
    %6 = vector.broadcast %cst_5 : f32 to vector<8x512xf32>
    %7 = arith.cmpf ogt, %5, %6 : vector<8x512xf32>
    %cst_6 = arith.constant 0.00999999977 : f32
    %8 = vector.broadcast %cst_6 : f32 to vector<8x512xf32>
    %9 = arith.mulf %8, %5 : vector<8x512xf32>
    %10 = arith.select %7, %5, %9 : vector<8x512xi1>, vector<8x512xf32>
    %11 = arith.truncf %10 : vector<8x512xf32> to vector<8x512xbf16>
    %c0_7 = arith.constant 0 : index
    %c0_8 = arith.constant 0 : index
    %12 = vector.load %arg4[%c0_7, %c0_8] : memref<512x512xbf16, #tpu.memory_space<vmem>>, vector<512x512xbf16>
    %cst_9 = arith.constant dense<0.000000e+00> : vector<8x512xf32>
    %13 = tpu.matmul %11, %12, %cst_9 {dimension_numbers = #tpu.dot_dimension_numbers<[1], [0], [0], [1], [0, 0, 1, 1], [], []>} : vector<8x512xbf16>, vector<512x512xbf16>, vector<8x512xf32> -> vector<8x512xf32>
    %c0_10 = arith.constant 0 : index
    %c0_11 = arith.constant 0 : index
    %14 = vector.load %arg5[%c0_10, %c0_11] : memref<1x512xf32, #tpu.memory_space<vmem>>, vector<1x512xf32>
    %15 = vector.broadcast %14 : vector<1x512xf32> to vector<8x512xf32>
    %16 = arith.addf %13, %15 : vector<8x512xf32>
    %cst_12 = arith.constant 0.000000e+00 : f32
    %17 = vector.broadcast %cst_12 : f32 to vector<8x512xf32>
    %18 = arith.cmpf ogt, %16, %17 : vector<8x512xf32>
    %cst_13 = arith.constant 0.00999999977 : f32
    %19 = vector.broadcast %cst_13 : f32 to vector<8x512xf32>
    %20 = arith.mulf %19, %16 : vector<8x512xf32>
    %21 = arith.select %18, %16, %20 : vector<8x512xi1>, vector<8x512xf32>
    %22 = arith.truncf %21 : vector<8x512xf32> to vector<8x512xbf16>
    %c0_14 = arith.constant 0 : index
    %c0_15 = arith.constant 0 : index
    %23 = vector.load %arg6[%c0_14, %c0_15] : memref<512x512xbf16, #tpu.memory_space<vmem>>, vector<512x512xbf16>
    %cst_16 = arith.constant dense<0.000000e+00> : vector<8x512xf32>
    %24 = tpu.matmul %22, %23, %cst_16 {dimension_numbers = #tpu.dot_dimension_numbers<[1], [0], [0], [1], [0, 0, 1, 1], [], []>} : vector<8x512xbf16>, vector<512x512xbf16>, vector<8x512xf32> -> vector<8x512xf32>
    %c0_17 = arith.constant 0 : index
    %c0_18 = arith.constant 0 : index
    %25 = vector.load %arg7[%c0_17, %c0_18] : memref<1x512xf32, #tpu.memory_space<vmem>>, vector<1x512xf32>
    %26 = vector.broadcast %25 : vector<1x512xf32> to vector<8x512xf32>
    %27 = arith.addf %24, %26 : vector<8x512xf32>
    %cst_19 = arith.constant 0.000000e+00 : f32
    %28 = vector.broadcast %cst_19 : f32 to vector<8x512xf32>
    %29 = arith.cmpf ogt, %27, %28 : vector<8x512xf32>
    %cst_20 = arith.constant 0.00999999977 : f32
    %30 = vector.broadcast %cst_20 : f32 to vector<8x512xf32>
    %31 = arith.mulf %30, %27 : vector<8x512xf32>
    %32 = arith.select %29, %27, %31 : vector<8x512xi1>, vector<8x512xf32>
    %33 = arith.truncf %32 : vector<8x512xf32> to vector<8x512xbf16>
    %c0_21 = arith.constant 0 : index
    %c0_22 = arith.constant 0 : index
    %34 = vector.load %arg8[%c0_21, %c0_22] : memref<512x128xbf16, #tpu.memory_space<vmem>>, vector<512x128xbf16>
    %cst_23 = arith.constant dense<0.000000e+00> : vector<8x128xf32>
    %35 = tpu.matmul %33, %34, %cst_23 {dimension_numbers = #tpu.dot_dimension_numbers<[1], [0], [0], [1], [0, 0, 1, 1], [], []>} : vector<8x512xbf16>, vector<512x128xbf16>, vector<8x128xf32> -> vector<8x128xf32>
    %c0_24 = arith.constant 0 : index
    %c0_25 = arith.constant 0 : index
    %36 = vector.load %arg9[%c0_24, %c0_25] : memref<1x128xf32, #tpu.memory_space<vmem>>, vector<1x128xf32>
    %37 = vector.broadcast %36 : vector<1x128xf32> to vector<8x128xf32>
    %38 = arith.addf %35, %37 : vector<8x128xf32>
    %c0_26 = arith.constant 0 : index
    %c0_27 = arith.constant 0 : index
    %39 = vector.load %arg10[%c0_26, %c0_27] : memref<8x128xf32, #tpu.memory_space<vmem>>, vector<8x128xf32>
    tpu.vector_store %arg10[%c0_26, %c0_27], %38 {strides = array<i32>} : memref<8x128xf32, #tpu.memory_space<vmem>>, vector<8x128xf32>,
    return
  }
  func.func @transform_0(%arg0: i32) -> (i32, i32) {
    %c0_i32 = arith.constant 0 : i32
    %c0_i32_0 = arith.constant 0 : i32
    return %arg0, %c0_i32 : i32, i32
  }
  func.func @transform_1(%arg0: i32) -> (i32, i32) {
    %c0_i32 = arith.constant 0 : i32
    %c0_i32_0 = arith.constant 0 : i32
    %c0_i32_1 = arith.constant 0 : i32
    return %c0_i32, %c0_i32_0 : i32, i32
  }
  func.func @transform_2(%arg0: i32) -> (i32, i32) {
    %c0_i32 = arith.constant 0 : i32
    %c0_i32_0 = arith.constant 0 : i32
    %c0_i32_1 = arith.constant 0 : i32
    return %c0_i32, %c0_i32_0 : i32, i32
  }
  func.func @transform_3(%arg0: i32) -> (i32, i32) {
    %c0_i32 = arith.constant 0 : i32
    %c0_i32_0 = arith.constant 0 : i32
    %c0_i32_1 = arith.constant 0 : i32
    return %c0_i32, %c0_i32_0 : i32, i32
  }
  func.func @transform_4(%arg0: i32) -> (i32, i32) {
    %c0_i32 = arith.constant 0 : i32
    %c0_i32_0 = arith.constant 0 : i32
    %c0_i32_1 = arith.constant 0 : i32
    return %c0_i32, %c0_i32_0 : i32, i32
  }
  func.func @transform_5(%arg0: i32) -> (i32, i32) {
    %c0_i32 = arith.constant 0 : i32
    %c0_i32_0 = arith.constant 0 : i32
    %c0_i32_1 = arith.constant 0 : i32
    return %c0_i32, %c0_i32_0 : i32, i32
  }
  func.func @transform_6(%arg0: i32) -> (i32, i32) {
    %c0_i32 = arith.constant 0 : i32
    %c0_i32_0 = arith.constant 0 : i32
    %c0_i32_1 = arith.constant 0 : i32
    return %c0_i32, %c0_i32_0 : i32, i32
  }
  func.func @transform_7(%arg0: i32) -> (i32, i32) {
    %c0_i32 = arith.constant 0 : i32
    %c0_i32_0 = arith.constant 0 : i32
    %c0_i32_1 = arith.constant 0 : i32
    return %c0_i32, %c0_i32_0 : i32, i32
  }
  func.func @transform_8(%arg0: i32) -> (i32, i32) {
    %c0_i32 = arith.constant 0 : i32
    %c0_i32_0 = arith.constant 0 : i32
    %c0_i32_1 = arith.constant 0 : i32
    return %c0_i32, %c0_i32_0 : i32, i32
  }
  func.func @transform_9(%arg0: i32) -> (i32, i32) {
    %c0_i32 = arith.constant 0 : i32
    %c0_i32_0 = arith.constant 0 : i32
    return %arg0, %c0_i32 : i32, i32
  }
}

</mosaic_0001>

<llo_original>
// kernel: tpu_custom_call.1
$region0: #{tpu_custom_call.1}
  #allocation0 [shape = 'u32[]', space=smem, size = 0x4, offset = 0x4, fixed_abs, tag = 'smem constant byte address 0x4 - core index']
  #allocation1 [shape = 'u32[72,128]{1,0:T(1,128)}', space=vmem, size = 0x9000, scoped, tag = 'internal scratch']
  %s0 = inlined_call_operand.hbm [shape: bf16[8,128], index: 0, kind: input, shape index: {}]
  %s1 = inlined_call_operand.hbm [shape: bf16[128,512], index: 1, kind: input, shape index: {}]
  %s2 = inlined_call_operand.hbm [shape: f32[1,512], index: 2, kind: input, shape index: {}]
  %s3 = inlined_call_operand.hbm [shape: bf16[512,512], index: 3, kind: input, shape index: {}]
  %s4 = inlined_call_operand.hbm [shape: f32[1,512], index: 4, kind: input, shape index: {}]
  %s5 = inlined_call_operand.hbm [shape: bf16[512,512], index: 5, kind: input, shape index: {}]
  %s6 = inlined_call_operand.vmem [shape: f32[1,512], index: 6, kind: input, shape index: {}]
  %s7 = inlined_call_operand.hbm [shape: bf16[512,128], index: 7, kind: input, shape index: {}]
  %s8 = inlined_call_operand.vmem [shape: f32[1,128], index: 8, kind: input, shape index: {}]
  %s9 = inlined_call_operand.hbm [shape: f32[8,128], index: 9, kind: output, shape index: {}]
  %s10 = sld [smem:[#allocation0]]
  $region74: #{tpu_custom_call.1} parent=0
    _
  %s12 = ssub.s32 1, %s10
  %s13 = scalar_select 0, %s12, %s10
  $region1: #{tpu_custom_call.1} parent=0
    #allocation2 [shape = 'u8[2048]{0}', space=vmem, size = 0x800, scoped, tag = 'input window, operand 0, single buffered']
    #allocation3 [shape = 's32[1]{0}', space=sflag, size = 0x4, scoped, tag = 'scoped memory for tpu_custom_call.1']
    #allocation4 [shape = 's32[1]{0}', space=sflag, size = 0x4, scoped, tag = 'scoped memory for tpu_custom_call.1']
    #allocation5 [shape = 'u8[131072]{0}', space=vmem, size = 0x20000, scoped, tag = 'input window, operand 1, single buffered']
    #allocation6 [shape = 's32[1]{0}', space=sflag, size = 0x4, scoped, tag = 'scoped memory for tpu_custom_call.1']
    #allocation7 [shape = 'u8[2048]{0}', space=vmem, size = 0x800, scoped, tag = 'input window, operand 2, single buffered']
    #allocation8 [shape = 'u8[524288]{0}', space=vmem, size = 0x80000, scoped, tag = 'input window, operand 3, single buffered']
    #allocation9 [shape = 's32[1]{0}', space=sflag, size = 0x4, scoped, tag = 'scoped memory for tpu_custom_call.1']
    #allocation10 [shape = 'u8[2048]{0}', space=vmem, size = 0x800, scoped, tag = 'input window, operand 4, single buffered']
    #allocation11 [shape = 'u8[524288]{0}', space=vmem, size = 0x80000, scoped, tag = 'input window, operand 5, single buffered']
    #allocation12 [shape = 's32[1]{0}', space=sflag, size = 0x4, scoped, tag = 'scoped memory for tpu_custom_call.1']
    #allocation13 [shape = 'u8[131072]{0}', space=vmem, size = 0x20000, scoped, tag = 'input window, operand 7, single buffered']
    #allocation14 [shape = 'u8[4096]{0}', space=vmem, size = 0x1000, scoped, tag = 'output window, operand 0, single buffered']
    %14 = vsyncpa [#allocation3], 0
    %15 = vsyncpa [#allocation6], 0
    %16 = vsyncpa [#allocation9], 0
    %17 = vsyncpa [#allocation12], 0
    %18 = vsyncpa [#allocation4], 0
    // Predicated region
    $region2: #{tpu_custom_call.1} parent=1 // pred_check
      _
    $region3: #{tpu_custom_call.1} parent=1 // pred_check_branch
      %20 = sbr.rel (0) target = $region5
    $region4: #{tpu_custom_call.1} parent=1 // pred_region
      %22 = vsyncadd [#allocation3], 0
      %s24 = sshll.u32 %s0, 4
      %s25 = int_to_ptr.hbm [resolvable:$true] %s24
      %s26 = sshll.u32 [#allocation2], 4
      %s27 = int_to_ptr.vmem [resolvable:$true] %s26
      %29 = dma.hbm_to_vmem [thread:$0]  %s25, 64, %s27, [#allocation3]
    $region5: #{tpu_custom_call.1} parent=1 // pred_fallthru
      _
    // Predicated region
    $region6: #{tpu_custom_call.1} parent=1 // pred_check
      _
    $region7: #{tpu_custom_call.1} parent=1 // pred_check_branch
      %31 = sbr.rel (0) target = $region9
    $region8: #{tpu_custom_call.1} parent=1 // pred_region
      %33 = vsyncadd [#allocation6], 0
      %s34 = sshll.u32 %s1, 4
      %s35 = int_to_ptr.hbm [resolvable:$true] %s34
      %s36 = sshll.u32 [#allocation5], 4
      %s37 = int_to_ptr.vmem [resolvable:$true] %s36
      %42 = dma.hbm_to_vmem [thread:$0]  %s35, 4096, %s37, [#allocation6], 256, 256, 16
    $region9: #{tpu_custom_call.1} parent=1 // pred_fallthru
      _
    // Predicated region
    $region10: #{tpu_custom_call.1} parent=1 // pred_check
      _
    $region11: #{tpu_custom_call.1} parent=1 // pred_check_branch
      %44 = sbr.rel (0) target = $region13
    $region12: #{tpu_custom_call.1} parent=1 // pred_region
      %46 = vsyncadd [#allocation6], 0
      %s48 = sshll.u32 %s2, 4
      %s49 = int_to_ptr.hbm [resolvable:$true] %s48
      %s50 = sshll.u32 [#allocation7], 4
      %s51 = int_to_ptr.vmem [resolvable:$true] %s50
      %53 = dma.hbm_to_vmem [thread:$0]  %s49, 64, %s51, [#allocation6]
    $region13: #{tpu_custom_call.1} parent=1 // pred_fallthru
      _
    // Predicated region
    $region14: #{tpu_custom_call.1} parent=1 // pred_check
      _
    $region15: #{tpu_custom_call.1} parent=1 // pred_check_branch
      %55 = sbr.rel (0) target = $region17
    $region16: #{tpu_custom_call.1} parent=1 // pred_region
      %57 = vsyncadd [#allocation9], 0
      %s58 = sshll.u32 %s3, 4
      %s59 = int_to_ptr.hbm [resolvable:$true] %s58
      %s60 = sshll.u32 [#allocation8], 4
      %s61 = int_to_ptr.vmem [resolvable:$true] %s60
      %66 = dma.hbm_to_vmem [thread:$0]  %s59, 16384, %s61, [#allocation9], 256, 256, 16
    $region17: #{tpu_custom_call.1} parent=1 // pred_fallthru
      _
    // Predicated region
    $region18: #{tpu_custom_call.1} parent=1 // pred_check
      _
    $region19: #{tpu_custom_call.1} parent=1 // pred_check_branch
      %68 = sbr.rel (0) target = $region21
    $region20: #{tpu_custom_call.1} parent=1 // pred_region
      %70 = vsyncadd [#allocation9], 0
      %s72 = sshll.u32 %s4, 4
      %s73 = int_to_ptr.hbm [resolvable:$true] %s72
      %s74 = sshll.u32 [#allocation10], 4
      %s75 = int_to_ptr.vmem [resolvable:$true] %s74
      %77 = dma.hbm_to_vmem [thread:$0]  %s73, 64, %s75, [#allocation9]
    $region21: #{tpu_custom_call.1} parent=1 // pred_fallthru
      _
    // Predicated region
    $region22: #{tpu_custom_call.1} parent=1 // pred_check
      _
    $region23: #{tpu_custom_call.1} parent=1 // pred_check_branch
      %79 = sbr.rel (0) target = $region25
    $region24: #{tpu_custom_call.1} parent=1 // pred_region
      %81 = vsyncadd [#allocation12], 0
      %s82 = sshll.u32 %s5, 4
      %s83 = int_to_ptr.hbm [resolvable:$true] %s82
      %s84 = sshll.u32 [#allocation11], 4
      %s85 = int_to_ptr.vmem [resolvable:$true] %s84
      %90 = dma.hbm_to_vmem [thread:$0]  %s83, 16384, %s85, [#allocation12], 256, 256, 16
    $region25: #{tpu_custom_call.1} parent=1 // pred_fallthru
      _
    // Predicated region
    $region26: #{tpu_custom_call.1} parent=1 // pred_check
      _
    $region27: #{tpu_custom_call.1} parent=1 // pred_check_branch
      %92 = sbr.rel (0) target = $region29
    $region28: #{tpu_custom_call.1} parent=1 // pred_region
      _
    $region29: #{tpu_custom_call.1} parent=1 // pred_fallthru
      _
    // Predicated region
    $region30: #{tpu_custom_call.1} parent=1 // pred_check
      _
    $region31: #{tpu_custom_call.1} parent=1 // pred_check_branch
      %94 = sbr.rel (0) target = $region33
    $region32: #{tpu_custom_call.1} parent=1 // pred_region
      %96 = vsyncadd [#allocation12], 0
      %s97 = sshll.u32 %s7, 4
      %s98 = int_to_ptr.hbm [resolvable:$true] %s97
      %s99 = sshll.u32 [#allocation13], 4
      %s100 = int_to_ptr.vmem [resolvable:$true] %s99
      %105 = dma.hbm_to_vmem [thread:$0]  %s98, 4096, %s100, [#allocation12], 64, 64, 4
    $region33: #{tpu_custom_call.1} parent=1 // pred_fallthru
      _
    // Predicated region
    $region34: #{tpu_custom_call.1} parent=1 // pred_check
      _
    $region35: #{tpu_custom_call.1} parent=1 // pred_check_branch
      %107 = sbr.rel (0) target = $region37
    $region36: #{tpu_custom_call.1} parent=1 // pred_region
      _
    $region37: #{tpu_custom_call.1} parent=1 // pred_fallthru
      _
    // Predicated region
    $region38: #{tpu_custom_call.1} parent=1 // pred_check
      _
    $region39: #{tpu_custom_call.1} parent=1 // pred_check_branch
      %109 = sbr.rel (0) target = $region41
    $region40: #{tpu_custom_call.1} parent=1 // pred_region
      %111 = dma.done [#allocation3], 64
    $region41: #{tpu_custom_call.1} parent=1 // pred_fallthru
      _
    // Predicated region
    $region42: #{tpu_custom_call.1} parent=1 // pred_check
      _
    $region43: #{tpu_custom_call.1} parent=1 // pred_check_branch
      %113 = sbr.rel (0) target = $region45
    $region44: #{tpu_custom_call.1} parent=1 // pred_region
      %115 = dma.done [#allocation6], 4096
    $region45: #{tpu_custom_call.1} parent=1 // pred_fallthru
      _
    // Predicated region
    $region46: #{tpu_custom_call.1} parent=1 // pred_check
      _
    $region47: #{tpu_custom_call.1} parent=1 // pred_check_branch
      %117 = sbr.rel (0) target = $region49
    $region48: #{tpu_custom_call.1} parent=1 // pred_region
      %119 = dma.done [#allocation6], 64
    $region49: #{tpu_custom_call.1} parent=1 // pred_fallthru
      _
    // Predicated region
    $region50: #{tpu_custom_call.1} parent=1 // pred_check
      _
    $region51: #{tpu_custom_call.1} parent=1 // pred_check_branch
      %121 = sbr.rel (0) target = $region53
    $region52: #{tpu_custom_call.1} parent=1 // pred_region
      %123 = dma.done [#allocation9], 16384
    $region53: #{tpu_custom_call.1} parent=1 // pred_fallthru
      _
    // Predicated region
    $region54: #{tpu_custom_call.1} parent=1 // pred_check
      _
    $region55: #{tpu_custom_call.1} parent=1 // pred_check_branch
      %125 = sbr.rel (0) target = $region57
    $region56: #{tpu_custom_call.1} parent=1 // pred_region
      %127 = dma.done [#allocation9], 64
    $region57: #{tpu_custom_call.1} parent=1 // pred_fallthru
      _
    // Predicated region
    $region58: #{tpu_custom_call.1} parent=1 // pred_check
      _
    $region59: #{tpu_custom_call.1} parent=1 // pred_check_branch
      %129 = sbr.rel (0) target = $region61
    $region60: #{tpu_custom_call.1} parent=1 // pred_region
      %131 = dma.done [#allocation12], 16384
    $region61: #{tpu_custom_call.1} parent=1 // pred_fallthru
      _
    // Predicated region
    $region62: #{tpu_custom_call.1} parent=1 // pred_check
      _
    $region63: #{tpu_custom_call.1} parent=1 // pred_check_branch
      %133 = sbr.rel (0) target = $region65
    $region64: #{tpu_custom_call.1} parent=1 // pred_region
      %135 = dma.done [#allocation12], 4096
    $region65: #{tpu_custom_call.1} parent=1 // pred_fallthru
      _
    %v136 = vld [vmem:[#allocation2] sm:$0xf]
    %v137 = vld [vmem:[#allocation5] sm:$0xff]
    %v138 = vld [vmem:[#allocation5 + $0x8] sm:$0xff]
    %v139 = vld [vmem:[#allocation5 + $0x10] sm:$0xff]
    %v140 = vld [vmem:[#allocation5 + $0x18] sm:$0xff]
    %v141 = vld [vmem:[#allocation5 + $0x20] sm:$0xff]
    %v142 = vld [vmem:[#allocation5 + $0x28] sm:$0xff]
    %v143 = vld [vmem:[#allocation5 + $0x30] sm:$0xff]
    %v144 = vld [vmem:[#allocation5 + $0x38] sm:$0xff]
    %v145 = vld [vmem:[#allocation5 + $0x40] sm:$0xff]
    %v146 = vld [vmem:[#allocation5 + $0x48] sm:$0xff]
    %v147 = vld [vmem:[#allocation5 + $0x50] sm:$0xff]
    %v148 = vld [vmem:[#allocation5 + $0x58] sm:$0xff]
    %v149 = vld [vmem:[#allocation5 + $0x60] sm:$0xff]
    %v150 = vld [vmem:[#allocation5 + $0x68] sm:$0xff]
    %v151 = vld [vmem:[#allocation5 + $0x70] sm:$0xff]
    %v152 = vld [vmem:[#allocation5 + $0x78] sm:$0xff]
    %v153 = vld [vmem:[#allocation5 + $0x80] sm:$0xff]
    %v154 = vld [vmem:[#allocation5 + $0x88] sm:$0xff]
    %v155 = vld [vmem:[#allocation5 + $0x90] sm:$0xff]
    %v156 = vld [vmem:[#allocation5 + $0x98] sm:$0xff]
    %v157 = vld [vmem:[#allocation5 + $0xa0] sm:$0xff]
    %v158 = vld [vmem:[#allocation5 + $0xa8] sm:$0xff]
    %v159 = vld [vmem:[#allocation5 + $0xb0] sm:$0xff]
    %v160 = vld [vmem:[#allocation5 + $0xb8] sm:$0xff]
    %v161 = vld [vmem:[#allocation5 + $0xc0] sm:$0xff]
    %v162 = vld [vmem:[#allocation5 + $0xc8] sm:$0xff]
    %v163 = vld [vmem:[#allocation5 + $0xd0] sm:$0xff]
    %v164 = vld [vmem:[#allocation5 + $0xd8] sm:$0xff]
    %v165 = vld [vmem:[#allocation5 + $0xe0] sm:$0xff]
    %v166 = vld [vmem:[#allocation5 + $0xe8] sm:$0xff]
    %v167 = vld [vmem:[#allocation5 + $0xf0] sm:$0xff]
    %v168 = vld [vmem:[#allocation5 + $0xf8] sm:$0xff]
    %v169 = vld [vmem:[#allocation7] sm:$0xf]
    %v171 = vperm.slane %v169, 0
    %v172 = vperm.slane %v169, 1
    %v173 = vperm.slane %v169, 2
    %v174 = vperm.slane %v169, 3
    %v211 = vunpack.c.l.b16 %v137
    %v212 = vunpack.c.h.b16 %v137
    %v213 = vunpack.c.l.b16 %v138
    %v214 = vunpack.c.h.b16 %v138
    %v215 = vunpack.c.l.b16 %v139
    %v216 = vunpack.c.h.b16 %v139
    %v217 = vunpack.c.l.b16 %v140
    %v218 = vunpack.c.h.b16 %v140
    %v219 = vunpack.c.l.b16 %v141
    %v220 = vunpack.c.h.b16 %v141
    %v221 = vunpack.c.l.b16 %v142
    %v222 = vunpack.c.h.b16 %v142
    %v223 = vunpack.c.l.b16 %v143
    %v224 = vunpack.c.h.b16 %v143
    %v225 = vunpack.c.l.b16 %v144
    %v226 = vunpack.c.h.b16 %v144
    %v227 = vunpack.c.l.b16 %v145
    %v228 = vunpack.c.h.b16 %v145
    %v229 = vunpack.c.l.b16 %v146
    %v230 = vunpack.c.h.b16 %v146
    %v231 = vunpack.c.l.b16 %v147
    %v232 = vunpack.c.h.b16 %v147
    %v233 = vunpack.c.l.b16 %v148
    %v234 = vunpack.c.h.b16 %v148
    %v235 = vunpack.c.l.b16 %v149
    %v236 = vunpack.c.h.b16 %v149
    %v237 = vunpack.c.l.b16 %v150
    %v238 = vunpack.c.h.b16 %v150
    %v239 = vunpack.c.l.b16 %v151
    %v240 = vunpack.c.h.b16 %v151
    %v241 = vunpack.c.l.b16 %v152
    %v242 = vunpack.c.h.b16 %v152
    %v243 = vunpack.c.l.b16 %v153
    %v244 = vunpack.c.h.b16 %v153
    %v245 = vunpack.c.l.b16 %v154
    %v246 = vunpack.c.h.b16 %v154
    %v247 = vunpack.c.l.b16 %v155
    %v248 = vunpack.c.h.b16 %v155
    %v249 = vunpack.c.l.b16 %v156
    %v250 = vunpack.c.h.b16 %v156
    %v251 = vunpack.c.l.b16 %v157
    %v252 = vunpack.c.h.b16 %v157
    %v253 = vunpack.c.l.b16 %v158
    %v254 = vunpack.c.h.b16 %v158
    %v255 = vunpack.c.l.b16 %v159
    %v256 = vunpack.c.h.b16 %v159
    %v257 = vunpack.c.l.b16 %v160
    %v258 = vunpack.c.h.b16 %v160
    %v259 = vunpack.c.l.b16 %v161
    %v260 = vunpack.c.h.b16 %v161
    %v261 = vunpack.c.l.b16 %v162
    %v262 = vunpack.c.h.b16 %v162
    %v263 = vunpack.c.l.b16 %v163
    %v264 = vunpack.c.h.b16 %v163
    %v265 = vunpack.c.l.b16 %v164
    %v266 = vunpack.c.h.b16 %v164
    %v267 = vunpack.c.l.b16 %v165
    %v268 = vunpack.c.h.b16 %v165
    %v269 = vunpack.c.l.b16 %v166
    %v270 = vunpack.c.h.b16 %v166
    %v271 = vunpack.c.l.b16 %v167
    %v272 = vunpack.c.h.b16 %v167
    %v273 = vunpack.c.l.b16 %v168
    %v274 = vunpack.c.h.b16 %v168
    %v275 = vpack.c.b16 %v215, %v211
    %v276 = vpack.c.b16 %v216, %v212
    %v277 = vpack.c.b16 %v217, %v213
    %v278 = vpack.c.b16 %v218, %v214
    %v279 = vpack.c.b16 %v223, %v219
    %v280 = vpack.c.b16 %v224, %v220
    %v281 = vpack.c.b16 %v225, %v221
    %v282 = vpack.c.b16 %v226, %v222
    %v283 = vpack.c.b16 %v231, %v227
    %v284 = vpack.c.b16 %v232, %v228
    %v285 = vpack.c.b16 %v233, %v229
    %v286 = vpack.c.b16 %v234, %v230
    %v287 = vpack.c.b16 %v239, %v235
    %v288 = vpack.c.b16 %v240, %v236
    %v289 = vpack.c.b16 %v241, %v237
    %v290 = vpack.c.b16 %v242, %v238
    %v291 = vpack.c.b16 %v247, %v243
    %v292 = vpack.c.b16 %v248, %v244
    %v293 = vpack.c.b16 %v249, %v245
    %v294 = vpack.c.b16 %v250, %v246
    %v295 = vpack.c.b16 %v255, %v251
    %v296 = vpack.c.b16 %v256, %v252
    %v297 = vpack.c.b16 %v257, %v253
    %v298 = vpack.c.b16 %v258, %v254
    %v299 = vpack.c.b16 %v263, %v259
    %v300 = vpack.c.b16 %v264, %v260
    %v301 = vpack.c.b16 %v265, %v261
    %v302 = vpack.c.b16 %v266, %v262
    %v303 = vpack.c.b16 %v271, %v267
    %v304 = vpack.c.b16 %v272, %v268
    %v305 = vpack.c.b16 %v273, %v269
    %v306 = vpack.c.b16 %v274, %v270
    %339 = vmatpush.bf16.msra.mxu0 %v303
    %340 = vmatpush.bf16.msra.mxu0 %v299
    %341 = vmatpush.bf16.msra.mxu0 %v295
    %342 = vmatpush.bf16.msra.mxu0 %v291
    %343 = vmatpush.bf16.msra.mxu0 %v287
    %344 = vmatpush.bf16.msra.mxu0 %v283
    %345 = vmatpush.bf16.msra.mxu0 %v279
    %346 = vmatpush.bf16.msra.mxu0 %v275
    %347 = vmatmul.bf16.gmra.mxu0 %v136
    %v348 = vpop.f32.mrf.mxu0
    %v349 = vadd.f32 %v171, %v348
    %v350 = vpop.f32.mrf.mxu0
    %351 = vdwg.mxu0
    %352 = vmatpush.bf16.msra.mxu0 %v304
    %353 = vmatpush.bf16.msra.mxu0 %v300
    %354 = vmatpush.bf16.msra.mxu0 %v296
    %355 = vmatpush.bf16.msra.mxu0 %v292
    %356 = vmatpush.bf16.msra.mxu0 %v288
    %357 = vmatpush.bf16.msra.mxu0 %v284
    %358 = vmatpush.bf16.msra.mxu0 %v280
    %359 = vmatpush.bf16.msra.mxu0 %v276
    %360 = vmatmul.bf16.gmra.mxu0 %v136
    %v361 = vpop.f32.mrf.mxu0
    %v362 = vadd.f32 %v172, %v361
    %v363 = vpop.f32.mrf.mxu0
    %364 = vdwg.mxu0
    %365 = vmatpush.bf16.msra.mxu0 %v305
    %366 = vmatpush.bf16.msra.mxu0 %v301
    %367 = vmatpush.bf16.msra.mxu0 %v297
    %368 = vmatpush.bf16.msra.mxu0 %v293
    %369 = vmatpush.bf16.msra.mxu0 %v289
    %370 = vmatpush.bf16.msra.mxu0 %v285
    %371 = vmatpush.bf16.msra.mxu0 %v281
    %372 = vmatpush.bf16.msra.mxu0 %v277
    %373 = vmatmul.bf16.gmra.mxu0 %v136
    %v374 = vpop.f32.mrf.mxu0
    %v375 = vadd.f32 %v173, %v374
    %v376 = vpop.f32.mrf.mxu0
    %377 = vdwg.mxu0
    %378 = vmatpush.bf16.msra.mxu0 %v306
    %379 = vmatpush.bf16.msra.mxu0 %v302
    %380 = vmatpush.bf16.msra.mxu0 %v298
    %381 = vmatpush.bf16.msra.mxu0 %v294
    %382 = vmatpush.bf16.msra.mxu0 %v290
    %383 = vmatpush.bf16.msra.mxu0 %v286
    %384 = vmatpush.bf16.msra.mxu0 %v282
    %385 = vmatpush.bf16.msra.mxu0 %v278
    %386 = vmatmul.bf16.gmra.mxu0 %v136
    %v387 = vpop.f32.mrf.mxu0
    %v388 = vadd.f32 %v174, %v387
    %v389 = vpop.f32.mrf.mxu0
    %390 = vdwg.mxu0
    %vm391 = vcmp.gt.f32.partialorder %v349, 0.0
    %vm392 = vcmp.gt.f32.partialorder %v362, 0.0
    %vm393 = vcmp.gt.f32.partialorder %v375, 0.0
    %vm394 = vcmp.gt.f32.partialorder %v388, 0.0
    %v395 = vmul.f32 %v349, 0.01
    %v396 = vmul.f32 %v362, 0.01
    %v397 = vmul.f32 %v375, 0.01
    %v398 = vmul.f32 %v388, 0.01
    %v399 = vsel %vm391, %v349, %v395
    %v400 = vsel %vm392, %v362, %v396
    %v401 = vsel %vm393, %v375, %v397
    %v402 = vsel %vm394, %v388, %v398
    %v403 = vpack.c.bf16 %v399, %v399
    %v404 = vpack.c.bf16 %v400, %v400
    %v405 = vpack.c.bf16 %v401, %v401
    %v406 = vpack.c.bf16 %v402, %v402
    %v407 = vld [vmem:[#allocation8] sm:$0xff]
    %v408 = vld [vmem:[#allocation8 + $0x8] sm:$0xff]
    %v409 = vld [vmem:[#allocation8 + $0x10] sm:$0xff]
    %v410 = vld [vmem:[#allocation8 + $0x18] sm:$0xff]
    %v411 = vld [vmem:[#allocation8 + $0x20] sm:$0xff]
    %v412 = vld [vmem:[#allocation8 + $0x28] sm:$0xff]
    %v413 = vld [vmem:[#allocation8 + $0x30] sm:$0xff]
    %v414 = vld [vmem:[#allocation8 + $0x38] sm:$0xff]
    %v415 = vld [vmem:[#allocation8 + $0x40] sm:$0xff]
    %v416 = vld [vmem:[#allocation8 + $0x48] sm:$0xff]
    %v417 = vld [vmem:[#allocation8 + $0x50] sm:$0xff]
    %v418 = vld [vmem:[#allocation8 + $0x58] sm:$0xff]
    %v419 = vld [vmem:[#allocation8 + $0x60] sm:$0xff]
    %v420 = vld [vmem:[#allocation8 + $0x68] sm:$0xff]
    %v421 = vld [vmem:[#allocation8 + $0x70] sm:$0xff]
    %v422 = vld [vmem:[#allocation8 + $0x78] sm:$0xff]
    %v423 = vld [vmem:[#allocation8 + $0x80] sm:$0xff]
    %v424 = vld [vmem:[#allocation8 + $0x88] sm:$0xff]
    %v425 = vld [vmem:[#allocation8 + $0x90] sm:$0xff]
    %v426 = vld [vmem:[#allocation8 + $0x98] sm:$0xff]
    %v427 = vld [vmem:[#allocation8 + $0xa0] sm:$0xff]
    %v428 = vld [vmem:[#allocation8 + $0xa8] sm:$0xff]
    %v429 = vld [vmem:[#allocation8 + $0xb0] sm:$0xff]
    %v430 = vld [vmem:[#allocation8 + $0xb8] sm:$0xff]
    %v431 = vld [vmem:[#allocation8 + $0xc0] sm:$0xff]
    %v432 = vld [vmem:[#allocation8 + $0xc8] sm:$0xff]
    %v433 = vld [vmem:[#allocation8 + $0xd0] sm:$0xff]
    %v434 = vld [vmem:[#allocation8 + $0xd8] sm:$0xff]
    %v435 = vld [vmem:[#allocation8 + $0xe0] sm:$0xff]
    %v436 = vld [vmem:[#allocation8 + $0xe8] sm:$0xff]
    %v437 = vld [vmem:[#allocation8 + $0xf0] sm:$0xff]
    %v438 = vld [vmem:[#allocation8 + $0xf8] sm:$0xff]
    %v439 = vld [vmem:[#allocation8 + $0x100] sm:$0xff]
    %v440 = vld [vmem:[#allocation8 + $0x108] sm:$0xff]
    %v441 = vld [vmem:[#allocation8 + $0x110] sm:$0xff]
    %v442 = vld [vmem:[#allocation8 + $0x118] sm:$0xff]
    %v443 = vld [vmem:[#allocation8 + $0x120] sm:$0xff]
    %v444 = vld [vmem:[#allocation8 + $0x128] sm:$0xff]
    %v445 = vld [vmem:[#allocation8 + $0x130] sm:$0xff]
    %v446 = vld [vmem:[#allocation8 + $0x138] sm:$0xff]
    %v447 = vld [vmem:[#allocation8 + $0x140] sm:$0xff]
    %v448 = vld [vmem:[#allocation8 + $0x148] sm:$0xff]
    %v449 = vld [vmem:[#allocation8 + $0x150] sm:$0xff]
    %v450 = vld [vmem:[#allocation8 + $0x158] sm:$0xff]
    %v451 = vld [vmem:[#allocation8 + $0x160] sm:$0xff]
    %v452 = vld [vmem:[#allocation8 + $0x168] sm:$0xff]
    %v453 = vld [vmem:[#allocation8 + $0x170] sm:$0xff]
    %v454 = vld [vmem:[#allocation8 + $0x178] sm:$0xff]
    %v455 = vld [vmem:[#allocation8 + $0x180] sm:$0xff]
    %v456 = vld [vmem:[#allocation8 + $0x188] sm:$0xff]
    %v457 = vld [vmem:[#allocation8 + $0x190] sm:$0xff]
    %v458 = vld [vmem:[#allocation8 + $0x198] sm:$0xff]
    %v459 = vld [vmem:[#allocation8 + $0x1a0] sm:$0xff]
    %v460 = vld [vmem:[#allocation8 + $0x1a8] sm:$0xff]
    %v461 = vld [vmem:[#allocation8 + $0x1b0] sm:$0xff]
    %v462 = vld [vmem:[#allocation8 + $0x1b8] sm:$0xff]
    %v463 = vld [vmem:[#allocation8 + $0x1c0] sm:$0xff]
    %v464 = vld [vmem:[#allocation8 + $0x1c8] sm:$0xff]
    %v465 = vld [vmem:[#allocation8 + $0x1d0] sm:$0xff]
    %v466 = vld [vmem:[#allocation8 + $0x1d8] sm:$0xff]
    %v467 = vld [vmem:[#allocation8 + $0x1e0] sm:$0xff]
    %v468 = vld [vmem:[#allocation8 + $0x1e8] sm:$0xff]
    %v469 = vld [vmem:[#allocation8 + $0x1f0] sm:$0xff]
    %v470 = vld [vmem:[#allocation8 + $0x1f8] sm:$0xff]
    %v471 = vld [vmem:[#allocation8 + $0x200] sm:$0xff]
    %v472 = vld [vmem:[#allocation8 + $0x208] sm:$0xff]
    %v473 = vld [vmem:[#allocation8 + $0x210] sm:$0xff]
    %v474 = vld [vmem:[#allocation8 + $0x218] sm:$0xff]
    %v475 = vld [vmem:[#allocation8 + $0x220] sm:$0xff]
    %v476 = vld [vmem:[#allocation8 + $0x228] sm:$0xff]
    %v477 = vld [vmem:[#allocation8 + $0x230] sm:$0xff]
    %v478 = vld [vmem:[#allocation8 + $0x238] sm:$0xff]
    %v479 = vld [vmem:[#allocation8 + $0x240] sm:$0xff]
    %v480 = vld [vmem:[#allocation8 + $0x248] sm:$0xff]
    %v481 = vld [vmem:[#allocation8 + $0x250] sm:$0xff]
    %v482 = vld [vmem:[#allocation8 + $0x258] sm:$0xff]
    %v483 = vld [vmem:[#allocation8 + $0x260] sm:$0xff]
    %v484 = vld [vmem:[#allocation8 + $0x268] sm:$0xff]
    %v485 = vld [vmem:[#allocation8 + $0x270] sm:$0xff]
    %v486 = vld [vmem:[#allocation8 + $0x278] sm:$0xff]
    %v487 = vld [vmem:[#allocation8 + $0x280] sm:$0xff]
    %v488 = vld [vmem:[#allocation8 + $0x288] sm:$0xff]
    %v489 = vld [vmem:[#allocation8 + $0x290] sm:$0xff]
    %v490 = vld [vmem:[#allocation8 + $0x298] sm:$0xff]
    %v491 = vld [vmem:[#allocation8 + $0x2a0] sm:$0xff]
    %v492 = vld [vmem:[#allocation8 + $0x2a8] sm:$0xff]
    %v493 = vld [vmem:[#allocation8 + $0x2b0] sm:$0xff]
    %v494 = vld [vmem:[#allocation8 + $0x2b8] sm:$0xff]
    %v495 = vld [vmem:[#allocation8 + $0x2c0] sm:$0xff]
    %v496 = vld [vmem:[#allocation8 + $0x2c8] sm:$0xff]
    %v497 = vld [vmem:[#allocation8 + $0x2d0] sm:$0xff]
    %v498 = vld [vmem:[#allocation8 + $0x2d8] sm:$0xff]
    %v499 = vld [vmem:[#allocation8 + $0x2e0] sm:$0xff]
    %v500 = vld [vmem:[#allocation8 + $0x2e8] sm:$0xff]
    %v501 = vld [vmem:[#allocation8 + $0x2f0] sm:$0xff]
    %v502 = vld [vmem:[#allocation8 + $0x2f8] sm:$0xff]
    %v503 = vld [vmem:[#allocation8 + $0x300] sm:$0xff]
    %v504 = vld [vmem:[#allocation8 + $0x308] sm:$0xff]
    %v505 = vld [vmem:[#allocation8 + $0x310] sm:$0xff]
    %v506 = vld [vmem:[#allocation8 + $0x318] sm:$0xff]
    %v507 = vld [vmem:[#allocation8 + $0x320] sm:$0xff]
    %v508 = vld [vmem:[#allocation8 + $0x328] sm:$0xff]
    %v509 = vld [vmem:[#allocation8 + $0x330] sm:$0xff]
    %v510 = vld [vmem:[#allocation8 + $0x338] sm:$0xff]
    %v511 = vld [vmem:[#allocation8 + $0x340] sm:$0xff]
    %v512 = vld [vmem:[#allocation8 + $0x348] sm:$0xff]
    %v513 = vld [vmem:[#allocation8 + $0x350] sm:$0xff]
    %v514 = vld [vmem:[#allocation8 + $0x358] sm:$0xff]
    %v515 = vld [vmem:[#allocation8 + $0x360] sm:$0xff]
    %v516 = vld [vmem:[#allocation8 + $0x368] sm:$0xff]
    %v517 = vld [vmem:[#allocation8 + $0x370] sm:$0xff]
    %v518 = vld [vmem:[#allocation8 + $0x378] sm:$0xff]
    %v519 = vld [vmem:[#allocation8 + $0x380] sm:$0xff]
    %v520 = vld [vmem:[#allocation8 + $0x388] sm:$0xff]
    %v521 = vld [vmem:[#allocation8 + $0x390] sm:$0xff]
    %v522 = vld [vmem:[#allocation8 + $0x398] sm:$0xff]
    %v523 = vld [vmem:[#allocation8 + $0x3a0] sm:$0xff]
    %v524 = vld [vmem:[#allocation8 + $0x3a8] sm:$0xff]
    %v525 = vld [vmem:[#allocation8 + $0x3b0] sm:$0xff]
    %v526 = vld [vmem:[#allocation8 + $0x3b8] sm:$0xff]
    %v527 = vld [vmem:[#allocation8 + $0x3c0] sm:$0xff]
    %v528 = vld [vmem:[#allocation8 + $0x3c8] sm:$0xff]
    %v529 = vld [vmem:[#allocation8 + $0x3d0] sm:$0xff]
    %v530 = vld [vmem:[#allocation8 + $0x3d8] sm:$0xff]
    %v531 = vld [vmem:[#allocation8 + $0x3e0] sm:$0xff]
    %v532 = vld [vmem:[#allocation8 + $0x3e8] sm:$0xff]
    %v533 = vld [vmem:[#allocation8 + $0x3f0] sm:$0xff]
    %v534 = vld [vmem:[#allocation8 + $0x3f8] sm:$0xff]
    %v535 = vld [vmem:[#allocation10] sm:$0xf]
    %v537 = vperm.slane %v535, 0
    %v538 = vperm.slane %v535, 1
    %v539 = vperm.slane %v535, 2
    %v540 = vperm.slane %v535, 3
    %v673 = vunpack.c.l.b16 %v407
    %v674 = vunpack.c.h.b16 %v407
    %v675 = vunpack.c.l.b16 %v408
    %v676 = vunpack.c.h.b16 %v408
    %v677 = vunpack.c.l.b16 %v409
    %v678 = vunpack.c.h.b16 %v409
    %v679 = vunpack.c.l.b16 %v410
    %v680 = vunpack.c.h.b16 %v410
    %v681 = vunpack.c.l.b16 %v411
    %v682 = vunpack.c.h.b16 %v411
    %v683 = vunpack.c.l.b16 %v412
    %v684 = vunpack.c.h.b16 %v412
    %v685 = vunpack.c.l.b16 %v413
    %v686 = vunpack.c.h.b16 %v413
    %v687 = vunpack.c.l.b16 %v414
    %v688 = vunpack.c.h.b16 %v414
    %v689 = vunpack.c.l.b16 %v415
    %v690 = vunpack.c.h.b16 %v415
    %v691 = vunpack.c.l.b16 %v416
    %v692 = vunpack.c.h.b16 %v416
    %v693 = vunpack.c.l.b16 %v417
    %v694 = vunpack.c.h.b16 %v417
    %v695 = vunpack.c.l.b16 %v418
    %v696 = vunpack.c.h.b16 %v418
    %v697 = vunpack.c.l.b16 %v419
    %v698 = vunpack.c.h.b16 %v419
    %v699 = vunpack.c.l.b16 %v420
    %v700 = vunpack.c.h.b16 %v420
    %v701 = vunpack.c.l.b16 %v421
    %v702 = vunpack.c.h.b16 %v421
    %v703 = vunpack.c.l.b16 %v422
    %v704 = vunpack.c.h.b16 %v422
    %v705 = vunpack.c.l.b16 %v423
    %v706 = vunpack.c.h.b16 %v423
    %v707 = vunpack.c.l.b16 %v424
    %v708 = vunpack.c.h.b16 %v424
    %v709 = vunpack.c.l.b16 %v425
    %v710 = vunpack.c.h.b16 %v425
    %v711 = vunpack.c.l.b16 %v426
    %v712 = vunpack.c.h.b16 %v426
    %v713 = vunpack.c.l.b16 %v427
    %v714 = vunpack.c.h.b16 %v427
    %v715 = vunpack.c.l.b16 %v428
    %v716 = vunpack.c.h.b16 %v428
    %v717 = vunpack.c.l.b16 %v429
    %v718 = vunpack.c.h.b16 %v429
    %v719 = vunpack.c.l.b16 %v430
    %v720 = vunpack.c.h.b16 %v430
    %v721 = vunpack.c.l.b16 %v431
    %v722 = vunpack.c.h.b16 %v431
    %v723 = vunpack.c.l.b16 %v432
    %v724 = vunpack.c.h.b16 %v432
    %v725 = vunpack.c.l.b16 %v433
    %v726 = vunpack.c.h.b16 %v433
    %v727 = vunpack.c.l.b16 %v434
    %v728 = vunpack.c.h.b16 %v434
    %v729 = vunpack.c.l.b16 %v435
    %v730 = vunpack.c.h.b16 %v435
    %v731 = vunpack.c.l.b16 %v436
    %v732 = vunpack.c.h.b16 %v436
    %v733 = vunpack.c.l.b16 %v437
    %v734 = vunpack.c.h.b16 %v437
    %v735 = vunpack.c.l.b16 %v438
    %v736 = vunpack.c.h.b16 %v438
    %v737 = vunpack.c.l.b16 %v439
    %v738 = vunpack.c.h.b16 %v439
    %v739 = vunpack.c.l.b16 %v440
    %v740 = vunpack.c.h.b16 %v440
    %v741 = vunpack.c.l.b16 %v441
    %v742 = vunpack.c.h.b16 %v441
    %v743 = vunpack.c.l.b16 %v442
    %v744 = vunpack.c.h.b16 %v442
    %v745 = vunpack.c.l.b16 %v443
    %v746 = vunpack.c.h.b16 %v443
    %v747 = vunpack.c.l.b16 %v444
    %v748 = vunpack.c.h.b16 %v444
    %v749 = vunpack.c.l.b16 %v445
    %v750 = vunpack.c.h.b16 %v445
    %v751 = vunpack.c.l.b16 %v446
    %v752 = vunpack.c.h.b16 %v446
    %v753 = vunpack.c.l.b16 %v447
    %v754 = vunpack.c.h.b16 %v447
    %v755 = vunpack.c.l.b16 %v448
    %v756 = vunpack.c.h.b16 %v448
    %v757 = vunpack.c.l.b16 %v449
    %v758 = vunpack.c.h.b16 %v449
    %v759 = vunpack.c.l.b16 %v450
    %v760 = vunpack.c.h.b16 %v450
    %v761 = vunpack.c.l.b16 %v451
    %v762 = vunpack.c.h.b16 %v451
    %v763 = vunpack.c.l.b16 %v452
    %v764 = vunpack.c.h.b16 %v452
    %v765 = vunpack.c.l.b16 %v453
    %v766 = vunpack.c.h.b16 %v453
    %v767 = vunpack.c.l.b16 %v454
    %v768 = vunpack.c.h.b16 %v454
    %v769 = vunpack.c.l.b16 %v455
    %v770 = vunpack.c.h.b16 %v455
    %v771 = vunpack.c.l.b16 %v456
    %v772 = vunpack.c.h.b16 %v456
    %v773 = vunpack.c.l.b16 %v457
    %v774 = vunpack.c.h.b16 %v457
    %v775 = vunpack.c.l.b16 %v458
    %v776 = vunpack.c.h.b16 %v458
    %v777 = vunpack.c.l.b16 %v459
    %v778 = vunpack.c.h.b16 %v459
    %v779 = vunpack.c.l.b16 %v460
    %v780 = vunpack.c.h.b16 %v460
    %v781 = vunpack.c.l.b16 %v461
    %v782 = vunpack.c.h.b16 %v461
    %v783 = vunpack.c.l.b16 %v462
    %v784 = vunpack.c.h.b16 %v462
    %v785 = vunpack.c.l.b16 %v463
    %v786 = vunpack.c.h.b16 %v463
    %v787 = vunpack.c.l.b16 %v464
    %v788 = vunpack.c.h.b16 %v464
    %v789 = vunpack.c.l.b16 %v465
    %v790 = vunpack.c.h.b16 %v465
    %v791 = vunpack.c.l.b16 %v466
    %v792 = vunpack.c.h.b16 %v466
    %v793 = vunpack.c.l.b16 %v467
    %v794 = vunpack.c.h.b16 %v467
    %v795 = vunpack.c.l.b16 %v468
    %v796 = vunpack.c.h.b16 %v468
    %v797 = vunpack.c.l.b16 %v469
    %v798 = vunpack.c.h.b16 %v469
    %v799 = vunpack.c.l.b16 %v470
    %v800 = vunpack.c.h.b16 %v470
    %v801 = vunpack.c.l.b16 %v471
    %v802 = vunpack.c.h.b16 %v471
    %v803 = vunpack.c.l.b16 %v472
    %v804 = vunpack.c.h.b16 %v472
    %v805 = vunpack.c.l.b16 %v473
    %v806 = vunpack.c.h.b16 %v473
    %v807 = vunpack.c.l.b16 %v474
    %v808 = vunpack.c.h.b16 %v474
    %v809 = vunpack.c.l.b16 %v475
    %v810 = vunpack.c.h.b16 %v475
    %v811 = vunpack.c.l.b16 %v476
    %v812 = vunpack.c.h.b16 %v476
    %v813 = vunpack.c.l.b16 %v477
    %v814 = vunpack.c.h.b16 %v477
    %v815 = vunpack.c.l.b16 %v478
    %v816 = vunpack.c.h.b16 %v478
    %v817 = vunpack.c.l.b16 %v479
    %v818 = vunpack.c.h.b16 %v479
    %v819 = vunpack.c.l.b16 %v480
    %v820 = vunpack.c.h.b16 %v480
    %v821 = vunpack.c.l.b16 %v481
    %v822 = vunpack.c.h.b16 %v481
    %v823 = vunpack.c.l.b16 %v482
    %v824 = vunpack.c.h.b16 %v482
    %v825 = vunpack.c.l.b16 %v483
    %v826 = vunpack.c.h.b16 %v483
    %v827 = vunpack.c.l.b16 %v484
    %v828 = vunpack.c.h.b16 %v484
    %v829 = vunpack.c.l.b16 %v485
    %v830 = vunpack.c.h.b16 %v485
    %v831 = vunpack.c.l.b16 %v486
    %v832 = vunpack.c.h.b16 %v486
    %v833 = vunpack.c.l.b16 %v487
    %v834 = vunpack.c.h.b16 %v487
    %v835 = vunpack.c.l.b16 %v488
    %v836 = vunpack.c.h.b16 %v488
    %v837 = vunpack.c.l.b16 %v489
    %v838 = vunpack.c.h.b16 %v489
    %v839 = vunpack.c.l.b16 %v490
    %v840 = vunpack.c.h.b16 %v490
    %v841 = vunpack.c.l.b16 %v491
    %v842 = vunpack.c.h.b16 %v491
    %v843 = vunpack.c.l.b16 %v492
    %v844 = vunpack.c.h.b16 %v492
    %v845 = vunpack.c.l.b16 %v493
    %v846 = vunpack.c.h.b16 %v493
    %v847 = vunpack.c.l.b16 %v494
    %v848 = vunpack.c.h.b16 %v494
    %v849 = vunpack.c.l.b16 %v495
    %v850 = vunpack.c.h.b16 %v495
    %v851 = vunpack.c.l.b16 %v496
    %v852 = vunpack.c.h.b16 %v496
    %v853 = vunpack.c.l.b16 %v497
    %v854 = vunpack.c.h.b16 %v497
    %v855 = vunpack.c.l.b16 %v498
    %v856 = vunpack.c.h.b16 %v498
    %v857 = vunpack.c.l.b16 %v499
    %v858 = vunpack.c.h.b16 %v499
    %v859 = vunpack.c.l.b16 %v500
    %v860 = vunpack.c.h.b16 %v500
    %v861 = vunpack.c.l.b16 %v501
    %v862 = vunpack.c.h.b16 %v501
    %v863 = vunpack.c.l.b16 %v502
    %v864 = vunpack.c.h.b16 %v502
    %v865 = vunpack.c.l.b16 %v503
    %v866 = vunpack.c.h.b16 %v503
    %v867 = vunpack.c.l.b16 %v504
    %v868 = vunpack.c.h.b16 %v504
    %v869 = vunpack.c.l.b16 %v505
    %v870 = vunpack.c.h.b16 %v505
    %v871 = vunpack.c.l.b16 %v506
    %v872 = vunpack.c.h.b16 %v506
    %v873 = vunpack.c.l.b16 %v507
    %v874 = vunpack.c.h.b16 %v507
    %v875 = vunpack.c.l.b16 %v508
    %v876 = vunpack.c.h.b16 %v508
    %v877 = vunpack.c.l.b16 %v509
    %v878 = vunpack.c.h.b16 %v509
    %v879 = vunpack.c.l.b16 %v510
    %v880 = vunpack.c.h.b16 %v510
    %v881 = vunpack.c.l.b16 %v511
    %v882 = vunpack.c.h.b16 %v511
    %v883 = vunpack.c.l.b16 %v512
    %v884 = vunpack.c.h.b16 %v512
    %v885 = vunpack.c.l.b16 %v513
    %v886 = vunpack.c.h.b16 %v513
    %v887 = vunpack.c.l.b16 %v514
    %v888 = vunpack.c.h.b16 %v514
    %v889 = vunpack.c.l.b16 %v515
    %v890 = vunpack.c.h.b16 %v515
    %v891 = vunpack.c.l.b16 %v516
    %v892 = vunpack.c.h.b16 %v516
    %v893 = vunpack.c.l.b16 %v517
    %v894 = vunpack.c.h.b16 %v517
    %v895 = vunpack.c.l.b16 %v518
    %v896 = vunpack.c.h.b16 %v518
    %v897 = vunpack.c.l.b16 %v519
    %v898 = vunpack.c.h.b16 %v519
    %v899 = vunpack.c.l.b16 %v520
    %v900 = vunpack.c.h.b16 %v520
    %v901 = vunpack.c.l.b16 %v521
    %v902 = vunpack.c.h.b16 %v521
    %v903 = vunpack.c.l.b16 %v522
    %v904 = vunpack.c.h.b16 %v522
    %v905 = vunpack.c.l.b16 %v523
    %v906 = vunpack.c.h.b16 %v523
    %v907 = vunpack.c.l.b16 %v524
    %v908 = vunpack.c.h.b16 %v524
    %v909 = vunpack.c.l.b16 %v525
    %v910 = vunpack.c.h.b16 %v525
    %v911 = vunpack.c.l.b16 %v526
    %v912 = vunpack.c.h.b16 %v526
    %v913 = vunpack.c.l.b16 %v527
    %v914 = vunpack.c.h.b16 %v527
    %v915 = vunpack.c.l.b16 %v528
    %v916 = vunpack.c.h.b16 %v528
    %v917 = vunpack.c.l.b16 %v529
    %v918 = vunpack.c.h.b16 %v529
    %v919 = vunpack.c.l.b16 %v530
    %v920 = vunpack.c.h.b16 %v530
    %v921 = vunpack.c.l.b16 %v531
    %v922 = vunpack.c.h.b16 %v531
    %v923 = vunpack.c.l.b16 %v532
    %v924 = vunpack.c.h.b16 %v532
    %v925 = vunpack.c.l.b16 %v533
    %v926 = vunpack.c.h.b16 %v533
    %v927 = vunpack.c.l.b16 %v534
    %v928 = vunpack.c.h.b16 %v534
    %v929 = vpack.c.b16 %v677, %v673
    %v930 = vpack.c.b16 %v678, %v674
    %v931 = vpack.c.b16 %v679, %v675
    %v932 = vpack.c.b16 %v680, %v676
    %v933 = vpack.c.b16 %v685, %v681
    %v934 = vpack.c.b16 %v686, %v682
    %v935 = vpack.c.b16 %v687, %v683
    %v936 = vpack.c.b16 %v688, %v684
    %v937 = vpack.c.b16 %v693, %v689
    %v938 = vpack.c.b16 %v694, %v690
    %v939 = vpack.c.b16 %v695, %v691
    %v940 = vpack.c.b16 %v696, %v692
    %v941 = vpack.c.b16 %v701, %v697
    %v942 = vpack.c.b16 %v702, %v698
    %v943 = vpack.c.b16 %v703, %v699
    %v944 = vpack.c.b16 %v704, %v700
    %v945 = vpack.c.b16 %v709, %v705
    %v946 = vpack.c.b16 %v710, %v706
    %v947 = vpack.c.b16 %v711, %v707
    %v948 = vpack.c.b16 %v712, %v708
    %v949 = vpack.c.b16 %v717, %v713
    %v950 = vpack.c.b16 %v718, %v714
    %v951 = vpack.c.b16 %v719, %v715
    %v952 = vpack.c.b16 %v720, %v716
    %v953 = vpack.c.b16 %v725, %v721
    %v954 = vpack.c.b16 %v726, %v722
    %v955 = vpack.c.b16 %v727, %v723
    %v956 = vpack.c.b16 %v728, %v724
    %v957 = vpack.c.b16 %v733, %v729
    %v958 = vpack.c.b16 %v734, %v730
    %v959 = vpack.c.b16 %v735, %v731
    %v960 = vpack.c.b16 %v736, %v732
    %v961 = vpack.c.b16 %v741, %v737
    %v962 = vpack.c.b16 %v742, %v738
    %v963 = vpack.c.b16 %v743, %v739
    %v964 = vpack.c.b16 %v744, %v740
    %v965 = vpack.c.b16 %v749, %v745
    %v966 = vpack.c.b16 %v750, %v746
    %v967 = vpack.c.b16 %v751, %v747
    %v968 = vpack.c.b16 %v752, %v748
    %v969 = vpack.c.b16 %v757, %v753
    %v970 = vpack.c.b16 %v758, %v754
    %v971 = vpack.c.b16 %v759, %v755
    %v972 = vpack.c.b16 %v760, %v756
    %v973 = vpack.c.b16 %v765, %v761
    %v974 = vpack.c.b16 %v766, %v762
    %v975 = vpack.c.b16 %v767, %v763
    %v976 = vpack.c.b16 %v768, %v764
    %v977 = vpack.c.b16 %v773, %v769
    %v978 = vpack.c.b16 %v774, %v770
    %v979 = vpack.c.b16 %v775, %v771
    %v980 = vpack.c.b16 %v776, %v772
    %v981 = vpack.c.b16 %v781, %v777
    %v982 = vpack.c.b16 %v782, %v778
    %v983 = vpack.c.b16 %v783, %v779
    %v984 = vpack.c.b16 %v784, %v780
    %v985 = vpack.c.b16 %v789, %v785
    %v986 = vpack.c.b16 %v790, %v786
    %v987 = vpack.c.b16 %v791, %v787
    %v988 = vpack.c.b16 %v792, %v788
    %v989 = vpack.c.b16 %v797, %v793
    %v990 = vpack.c.b16 %v798, %v794
    %v991 = vpack.c.b16 %v799, %v795
    %v992 = vpack.c.b16 %v800, %v796
    %v993 = vpack.c.b16 %v805, %v801
    %v994 = vpack.c.b16 %v806, %v802
    %v995 = vpack.c.b16 %v807, %v803
    %v996 = vpack.c.b16 %v808, %v804
    %v997 = vpack.c.b16 %v813, %v809
    %v998 = vpack.c.b16 %v814, %v810
    %v999 = vpack.c.b16 %v815, %v811
    %v1000 = vpack.c.b16 %v816, %v812
    %v1001 = vpack.c.b16 %v821, %v817
    %v1002 = vpack.c.b16 %v822, %v818
    %v1003 = vpack.c.b16 %v823, %v819
    %v1004 = vpack.c.b16 %v824, %v820
    %v1005 = vpack.c.b16 %v829, %v825
    %v1006 = vpack.c.b16 %v830, %v826
    %v1007 = vpack.c.b16 %v831, %v827
    %v1008 = vpack.c.b16 %v832, %v828
    %v1009 = vpack.c.b16 %v837, %v833
    %v1010 = vpack.c.b16 %v838, %v834
    %v1011 = vpack.c.b16 %v839, %v835
    %v1012 = vpack.c.b16 %v840, %v836
    %v1013 = vpack.c.b16 %v845, %v841
    %v1014 = vpack.c.b16 %v846, %v842
    %v1015 = vpack.c.b16 %v847, %v843
    %v1016 = vpack.c.b16 %v848, %v844
    %v1017 = vpack.c.b16 %v853, %v849
    %v1018 = vpack.c.b16 %v854, %v850
    %v1019 = vpack.c.b16 %v855, %v851
    %v1020 = vpack.c.b16 %v856, %v852
    %v1021 = vpack.c.b16 %v861, %v857
    %v1022 = vpack.c.b16 %v862, %v858
    %v1023 = vpack.c.b16 %v863, %v859
    %v1024 = vpack.c.b16 %v864, %v860
    %v1025 = vpack.c.b16 %v869, %v865
    %v1026 = vpack.c.b16 %v870, %v866
    %v1027 = vpack.c.b16 %v871, %v867
    %v1028 = vpack.c.b16 %v872, %v868
    %v1029 = vpack.c.b16 %v877, %v873
    %v1030 = vpack.c.b16 %v878, %v874
    %v1031 = vpack.c.b16 %v879, %v875
    %v1032 = vpack.c.b16 %v880, %v876
    %v1033 = vpack.c.b16 %v885, %v881
    %v1034 = vpack.c.b16 %v886, %v882
    %v1035 = vpack.c.b16 %v887, %v883
    %v1036 = vpack.c.b16 %v888, %v884
    %v1037 = vpack.c.b16 %v893, %v889
    %v1038 = vpack.c.b16 %v894, %v890
    %v1039 = vpack.c.b16 %v895, %v891
    %v1040 = vpack.c.b16 %v896, %v892
    %v1041 = vpack.c.b16 %v901, %v897
    %v1042 = vpack.c.b16 %v902, %v898
    %v1043 = vpack.c.b16 %v903, %v899
    %v1044 = vpack.c.b16 %v904, %v900
    %v1045 = vpack.c.b16 %v909, %v905
    %v1046 = vpack.c.b16 %v910, %v906
    %v1047 = vpack.c.b16 %v911, %v907
    %v1048 = vpack.c.b16 %v912, %v908
    %v1049 = vpack.c.b16 %v917, %v913
    %v1050 = vpack.c.b16 %v918, %v914
    %v1051 = vpack.c.b16 %v919, %v915
    %v1052 = vpack.c.b16 %v920, %v916
    %v1053 = vpack.c.b16 %v925, %v921
    %v1054 = vpack.c.b16 %v926, %v922
    %v1055 = vpack.c.b16 %v927, %v923
    %v1056 = vpack.c.b16 %v928, %v924
    %1185 = vmatpush.bf16.msra.mxu0 %v957
    %1186 = vmatpush.bf16.msra.mxu0 %v953
    %1187 = vmatpush.bf16.msra.mxu0 %v949
    %1188 = vmatpush.bf16.msra.mxu0 %v945
    %1189 = vmatpush.bf16.msra.mxu0 %v941
    %1190 = vmatpush.bf16.msra.mxu0 %v937
    %1191 = vmatpush.bf16.msra.mxu0 %v933
    %1192 = vmatpush.bf16.msra.mxu0 %v929
    %1193 = vmatmul.bf16.gmra.mxu0 %v403
    %v1194 = vpop.f32.mrf.mxu0
    %v1195 = vadd.f32 %v537, %v1194
    %v1196 = vpop.f32.mrf.mxu0
    %1197 = vdwg.mxu0
    %1198 = vmatpush.bf16.msra.mxu0 %v989
    %1199 = vmatpush.bf16.msra.mxu0 %v985
    %1200 = vmatpush.bf16.msra.mxu0 %v981
    %1201 = vmatpush.bf16.msra.mxu0 %v977
    %1202 = vmatpush.bf16.msra.mxu0 %v973
    %1203 = vmatpush.bf16.msra.mxu0 %v969
    %1204 = vmatpush.bf16.msra.mxu0 %v965
    %1205 = vmatpush.bf16.msra.mxu0 %v961
    %1206 = vmatmul.bf16.gmra.mxu0 %v404
    %v1207 = vpop.f32.mrf.mxu0
    %v1208 = vadd.f32 %v1195, %v1207
    %v1209 = vpop.f32.mrf.mxu0
    %1210 = vdwg.mxu0
    %1211 = vmatpush.bf16.msra.mxu0 %v1021
    %1212 = vmatpush.bf16.msra.mxu0 %v1017
    %1213 = vmatpush.bf16.msra.mxu0 %v1013
    %1214 = vmatpush.bf16.msra.mxu0 %v1009
    %1215 = vmatpush.bf16.msra.mxu0 %v1005
    %1216 = vmatpush.bf16.msra.mxu0 %v1001
    %1217 = vmatpush.bf16.msra.mxu0 %v997
    %1218 = vmatpush.bf16.msra.mxu0 %v993
    %1219 = vmatmul.bf16.gmra.mxu0 %v405
    %v1220 = vpop.f32.mrf.mxu0
    %v1221 = vadd.f32 %v1208, %v1220
    %v1222 = vpop.f32.mrf.mxu0
    %1223 = vdwg.mxu0
    %1224 = vmatpush.bf16.msra.mxu0 %v1053
    %1225 = vmatpush.bf16.msra.mxu0 %v1049
    %1226 = vmatpush.bf16.msra.mxu0 %v1045
    %1227 = vmatpush.bf16.msra.mxu0 %v1041
    %1228 = vmatpush.bf16.msra.mxu0 %v1037
    %1229 = vmatpush.bf16.msra.mxu0 %v1033
    %1230 = vmatpush.bf16.msra.mxu0 %v1029
    %1231 = vmatpush.bf16.msra.mxu0 %v1025
    %1232 = vmatmul.bf16.gmra.mxu0 %v406
    %v1233 = vpop.f32.mrf.mxu0
    %v1234 = vadd.f32 %v1221, %v1233
    %v1235 = vpop.f32.mrf.mxu0
    %1236 = vdwg.mxu0
    %1237 = vmatpush.bf16.msra.mxu0 %v958
    %1238 = vmatpush.bf16.msra.mxu0 %v954
    %1239 = vmatpush.bf16.msra.mxu0 %v950
    %1240 = vmatpush.bf16.msra.mxu0 %v946
    %1241 = vmatpush.bf16.msra.mxu0 %v942
    %1242 = vmatpush.bf16.msra.mxu0 %v938
    %1243 = vmatpush.bf16.msra.mxu0 %v934
    %1244 = vmatpush.bf16.msra.mxu0 %v930
    %1245 = vmatmul.bf16.gmra.mxu0 %v403
    %v1246 = vpop.f32.mrf.mxu0
    %v1247 = vadd.f32 %v538, %v1246
    %v1248 = vpop.f32.mrf.mxu0
    %1249 = vdwg.mxu0
    %1250 = vmatpush.bf16.msra.mxu0 %v990
    %1251 = vmatpush.bf16.msra.mxu0 %v986
    %1252 = vmatpush.bf16.msra.mxu0 %v982
    %1253 = vmatpush.bf16.msra.mxu0 %v978
    %1254 = vmatpush.bf16.msra.mxu0 %v974
    %1255 = vmatpush.bf16.msra.mxu0 %v970
    %1256 = vmatpush.bf16.msra.mxu0 %v966
    %1257 = vmatpush.bf16.msra.mxu0 %v962
    %1258 = vmatmul.bf16.gmra.mxu0 %v404
    %v1259 = vpop.f32.mrf.mxu0
    %v1260 = vadd.f32 %v1247, %v1259
    %v1261 = vpop.f32.mrf.mxu0
    %1262 = vdwg.mxu0
    %1263 = vmatpush.bf16.msra.mxu0 %v1022
    %1264 = vmatpush.bf16.msra.mxu0 %v1018
    %1265 = vmatpush.bf16.msra.mxu0 %v1014
    %1266 = vmatpush.bf16.msra.mxu0 %v1010
    %1267 = vmatpush.bf16.msra.mxu0 %v1006
    %1268 = vmatpush.bf16.msra.mxu0 %v1002
    %1269 = vmatpush.bf16.msra.mxu0 %v998
    %1270 = vmatpush.bf16.msra.mxu0 %v994
    %1271 = vmatmul.bf16.gmra.mxu0 %v405
    %v1272 = vpop.f32.mrf.mxu0
    %v1273 = vadd.f32 %v1260, %v1272
    %v1274 = vpop.f32.mrf.mxu0
    %1275 = vdwg.mxu0
    %1276 = vmatpush.bf16.msra.mxu0 %v1054
    %1277 = vmatpush.bf16.msra.mxu0 %v1050
    %1278 = vmatpush.bf16.msra.mxu0 %v1046
    %1279 = vmatpush.bf16.msra.mxu0 %v1042
    %1280 = vmatpush.bf16.msra.mxu0 %v1038
    %1281 = vmatpush.bf16.msra.mxu0 %v1034
    %1282 = vmatpush.bf16.msra.mxu0 %v1030
    %1283 = vmatpush.bf16.msra.mxu0 %v1026
    %1284 = vmatmul.bf16.gmra.mxu0 %v406
    %v1285 = vpop.f32.mrf.mxu0
    %v1286 = vadd.f32 %v1273, %v1285
    %v1287 = vpop.f32.mrf.mxu0
    %1288 = vdwg.mxu0
    %1289 = vmatpush.bf16.msra.mxu0 %v959
    %1290 = vmatpush.bf16.msra.mxu0 %v955
    %1291 = vmatpush.bf16.msra.mxu0 %v951
    %1292 = vmatpush.bf16.msra.mxu0 %v947
    %1293 = vmatpush.bf16.msra.mxu0 %v943
    %1294 = vmatpush.bf16.msra.mxu0 %v939
    %1295 = vmatpush.bf16.msra.mxu0 %v935
    %1296 = vmatpush.bf16.msra.mxu0 %v931
    %1297 = vmatmul.bf16.gmra.mxu0 %v403
    %v1298 = vpop.f32.mrf.mxu0
    %v1299 = vadd.f32 %v539, %v1298
    %v1300 = vpop.f32.mrf.mxu0
    %1301 = vdwg.mxu0
    %1302 = vmatpush.bf16.msra.mxu0 %v991
    %1303 = vmatpush.bf16.msra.mxu0 %v987
    %1304 = vmatpush.bf16.msra.mxu0 %v983
    %1305 = vmatpush.bf16.msra.mxu0 %v979
    %1306 = vmatpush.bf16.msra.mxu0 %v975
    %1307 = vmatpush.bf16.msra.mxu0 %v971
    %1308 = vmatpush.bf16.msra.mxu0 %v967
    %1309 = vmatpush.bf16.msra.mxu0 %v963
    %1310 = vmatmul.bf16.gmra.mxu0 %v404
    %v1311 = vpop.f32.mrf.mxu0
    %v1312 = vadd.f32 %v1299, %v1311
    %v1313 = vpop.f32.mrf.mxu0
    %1314 = vdwg.mxu0
    %1315 = vmatpush.bf16.msra.mxu0 %v1023
    %1316 = vmatpush.bf16.msra.mxu0 %v1019
    %1317 = vmatpush.bf16.msra.mxu0 %v1015
    %1318 = vmatpush.bf16.msra.mxu0 %v1011
    %1319 = vmatpush.bf16.msra.mxu0 %v1007
    %1320 = vmatpush.bf16.msra.mxu0 %v1003
    %1321 = vmatpush.bf16.msra.mxu0 %v999
    %1322 = vmatpush.bf16.msra.mxu0 %v995
    %1323 = vmatmul.bf16.gmra.mxu0 %v405
    %v1324 = vpop.f32.mrf.mxu0
    %v1325 = vadd.f32 %v1312, %v1324
    %v1326 = vpop.f32.mrf.mxu0
    %1327 = vdwg.mxu0
    %1328 = vmatpush.bf16.msra.mxu0 %v1055
    %1329 = vmatpush.bf16.msra.mxu0 %v1051
    %1330 = vmatpush.bf16.msra.mxu0 %v1047
    %1331 = vmatpush.bf16.msra.mxu0 %v1043
    %1332 = vmatpush.bf16.msra.mxu0 %v1039
    %1333 = vmatpush.bf16.msra.mxu0 %v1035
    %1334 = vmatpush.bf16.msra.mxu0 %v1031
    %1335 = vmatpush.bf16.msra.mxu0 %v1027
    %1336 = vmatmul.bf16.gmra.mxu0 %v406
    %v1337 = vpop.f32.mrf.mxu0
    %v1338 = vadd.f32 %v1325, %v1337
    %v1339 = vpop.f32.mrf.mxu0
    %1340 = vdwg.mxu0
    %1341 = vmatpush.bf16.msra.mxu0 %v960
    %1342 = vmatpush.bf16.msra.mxu0 %v956
    %1343 = vmatpush.bf16.msra.mxu0 %v952
    %1344 = vmatpush.bf16.msra.mxu0 %v948
    %1345 = vmatpush.bf16.msra.mxu0 %v944
    %1346 = vmatpush.bf16.msra.mxu0 %v940
    %1347 = vmatpush.bf16.msra.mxu0 %v936
    %1348 = vmatpush.bf16.msra.mxu0 %v932
    %1349 = vmatmul.bf16.gmra.mxu0 %v403
    %v1350 = vpop.f32.mrf.mxu0
    %v1351 = vadd.f32 %v540, %v1350
    %v1352 = vpop.f32.mrf.mxu0
    %1353 = vdwg.mxu0
    %1354 = vmatpush.bf16.msra.mxu0 %v992
    %1355 = vmatpush.bf16.msra.mxu0 %v988
    %1356 = vmatpush.bf16.msra.mxu0 %v984
    %1357 = vmatpush.bf16.msra.mxu0 %v980
    %1358 = vmatpush.bf16.msra.mxu0 %v976
    %1359 = vmatpush.bf16.msra.mxu0 %v972
    %1360 = vmatpush.bf16.msra.mxu0 %v968
    %1361 = vmatpush.bf16.msra.mxu0 %v964
    %1362 = vmatmul.bf16.gmra.mxu0 %v404
    %v1363 = vpop.f32.mrf.mxu0
    %v1364 = vadd.f32 %v1351, %v1363
    %v1365 = vpop.f32.mrf.mxu0
    %1366 = vdwg.mxu0
    %1367 = vmatpush.bf16.msra.mxu0 %v1024
    %1368 = vmatpush.bf16.msra.mxu0 %v1020
    %1369 = vmatpush.bf16.msra.mxu0 %v1016
    %1370 = vmatpush.bf16.msra.mxu0 %v1012
    %1371 = vmatpush.bf16.msra.mxu0 %v1008
    %1372 = vmatpush.bf16.msra.mxu0 %v1004
    %1373 = vmatpush.bf16.msra.mxu0 %v1000
    %1374 = vmatpush.bf16.msra.mxu0 %v996
    %1375 = vmatmul.bf16.gmra.mxu0 %v405
    %v1376 = vpop.f32.mrf.mxu0
    %v1377 = vadd.f32 %v1364, %v1376
    %v1378 = vpop.f32.mrf.mxu0
    %1379 = vdwg.mxu0
    %1380 = vmatpush.bf16.msra.mxu0 %v1056
    %1381 = vmatpush.bf16.msra.mxu0 %v1052
    %1382 = vmatpush.bf16.msra.mxu0 %v1048
    %1383 = vmatpush.bf16.msra.mxu0 %v1044
    %1384 = vmatpush.bf16.msra.mxu0 %v1040
    %1385 = vmatpush.bf16.msra.mxu0 %v1036
    %1386 = vmatpush.bf16.msra.mxu0 %v1032
    %1387 = vmatpush.bf16.msra.mxu0 %v1028
    %1388 = vmatmul.bf16.gmra.mxu0 %v406
    %v1389 = vpop.f32.mrf.mxu0
    %v1390 = vadd.f32 %v1377, %v1389
    %v1391 = vpop.f32.mrf.mxu0
    %1392 = vdwg.mxu0
    %vm1393 = vcmp.gt.f32.partialorder %v1234, 0.0
    %vm1394 = vcmp.gt.f32.partialorder %v1286, 0.0
    %vm1395 = vcmp.gt.f32.partialorder %v1338, 0.0
    %vm1396 = vcmp.gt.f32.partialorder %v1390, 0.0
    %v1397 = vmul.f32 %v1234, 0.01
    %v1398 = vmul.f32 %v1286, 0.01
    %v1399 = vmul.f32 %v1338, 0.01
    %v1400 = vmul.f32 %v1390, 0.01
    %v1401 = vsel %vm1393, %v1234, %v1397
    %v1402 = vsel %vm1394, %v1286, %v1398
    %v1403 = vsel %vm1395, %v1338, %v1399
    %v1404 = vsel %vm1396, %v1390, %v1400
    %v1405 = vpack.c.bf16 %v1401, %v1401
    %v1406 = vpack.c.bf16 %v1402, %v1402
    %v1407 = vpack.c.bf16 %v1403, %v1403
    %v1408 = vpack.c.bf16 %v1404, %v1404
    %v1409 = vld [vmem:[#allocation11] sm:$0xff]
    %v1410 = vld [vmem:[#allocation11 + $0x8] sm:$0xff]
    %v1411 = vld [vmem:[#allocation11 + $0x10] sm:$0xff]
    %v1412 = vld [vmem:[#allocation11 + $0x18] sm:$0xff]
    %v1413 = vld [vmem:[#allocation11 + $0x20] sm:$0xff]
    %v1414 = vld [vmem:[#allocation11 + $0x28] sm:$0xff]
    %v1415 = vld [vmem:[#allocation11 + $0x30] sm:$0xff]
    %v1416 = vld [vmem:[#allocation11 + $0x38] sm:$0xff]
    %v1417 = vld [vmem:[#allocation11 + $0x40] sm:$0xff]
    %v1418 = vld [vmem:[#allocation11 + $0x48] sm:$0xff]
    %v1419 = vld [vmem:[#allocation11 + $0x50] sm:$0xff]
    %v1420 = vld [vmem:[#allocation11 + $0x58] sm:$0xff]
    %v1421 = vld [vmem:[#allocation11 + $0x60] sm:$0xff]
    %v1422 = vld [vmem:[#allocation11 + $0x68] sm:$0xff]
    %v1423 = vld [vmem:[#allocation11 + $0x70] sm:$0xff]
    %v1424 = vld [vmem:[#allocation11 + $0x78] sm:$0xff]
    %v1425 = vld [vmem:[#allocation11 + $0x80] sm:$0xff]
    %v1426 = vld [vmem:[#allocation11 + $0x88] sm:$0xff]
    %v1427 = vld [vmem:[#allocation11 + $0x90] sm:$0xff]
    %v1428 = vld [vmem:[#allocation11 + $0x98] sm:$0xff]
    %v1429 = vld [vmem:[#allocation11 + $0xa0] sm:$0xff]
    %v1430 = vld [vmem:[#allocation11 + $0xa8] sm:$0xff]
    %v1431 = vld [vmem:[#allocation11 + $0xb0] sm:$0xff]
    %v1432 = vld [vmem:[#allocation11 + $0xb8] sm:$0xff]
    %v1433 = vld [vmem:[#allocation11 + $0xc0] sm:$0xff]
    %v1434 = vld [vmem:[#allocation11 + $0xc8] sm:$0xff]
    %v1435 = vld [vmem:[#allocation11 + $0xd0] sm:$0xff]
    %v1436 = vld [vmem:[#allocation11 + $0xd8] sm:$0xff]
    %v1437 = vld [vmem:[#allocation11 + $0xe0] sm:$0xff]
    %v1438 = vld [vmem:[#allocation11 + $0xe8] sm:$0xff]
    %v1439 = vld [vmem:[#allocation11 + $0xf0] sm:$0xff]
    %v1440 = vld [vmem:[#allocation11 + $0xf8] sm:$0xff]
    %v1441 = vld [vmem:[#allocation11 + $0x100] sm:$0xff]
    %v1442 = vld [vmem:[#allocation11 + $0x108] sm:$0xff]
    %v1443 = vld [vmem:[#allocation11 + $0x110] sm:$0xff]
    %v1444 = vld [vmem:[#allocation11 + $0x118] sm:$0xff]
    %v1445 = vld [vmem:[#allocation11 + $0x120] sm:$0xff]
    %v1446 = vld [vmem:[#allocation11 + $0x128] sm:$0xff]
    %v1447 = vld [vmem:[#allocation11 + $0x130] sm:$0xff]
    %v1448 = vld [vmem:[#allocation11 + $0x138] sm:$0xff]
    %v1449 = vld [vmem:[#allocation11 + $0x140] sm:$0xff]
    %v1450 = vld [vmem:[#allocation11 + $0x148] sm:$0xff]
    %v1451 = vld [vmem:[#allocation11 + $0x150] sm:$0xff]
    %v1452 = vld [vmem:[#allocation11 + $0x158] sm:$0xff]
    %v1453 = vld [vmem:[#allocation11 + $0x160] sm:$0xff]
    %v1454 = vld [vmem:[#allocation11 + $0x168] sm:$0xff]
    %v1455 = vld [vmem:[#allocation11 + $0x170] sm:$0xff]
    %v1456 = vld [vmem:[#allocation11 + $0x178] sm:$0xff]
    %v1457 = vld [vmem:[#allocation11 + $0x180] sm:$0xff]
    %v1458 = vld [vmem:[#allocation11 + $0x188] sm:$0xff]
    %v1459 = vld [vmem:[#allocation11 + $0x190] sm:$0xff]
    %v1460 = vld [vmem:[#allocation11 + $0x198] sm:$0xff]
    %v1461 = vld [vmem:[#allocation11 + $0x1a0] sm:$0xff]
    %v1462 = vld [vmem:[#allocation11 + $0x1a8] sm:$0xff]
    %v1463 = vld [vmem:[#allocation11 + $0x1b0] sm:$0xff]
    %v1464 = vld [vmem:[#allocation11 + $0x1b8] sm:$0xff]
    %v1465 = vld [vmem:[#allocation11 + $0x1c0] sm:$0xff]
    %v1466 = vld [vmem:[#allocation11 + $0x1c8] sm:$0xff]
    %v1467 = vld [vmem:[#allocation11 + $0x1d0] sm:$0xff]
    %v1468 = vld [vmem:[#allocation11 + $0x1d8] sm:$0xff]
    %v1469 = vld [vmem:[#allocation11 + $0x1e0] sm:$0xff]
    %v1470 = vld [vmem:[#allocation11 + $0x1e8] sm:$0xff]
    %v1471 = vld [vmem:[#allocation11 + $0x1f0] sm:$0xff]
    %v1472 = vld [vmem:[#allocation11 + $0x1f8] sm:$0xff]
    %v1473 = vld [vmem:[#allocation11 + $0x200] sm:$0xff]
    %v1474 = vld [vmem:[#allocation11 + $0x208] sm:$0xff]
    %v1475 = vld [vmem:[#allocation11 + $0x210] sm:$0xff]
    %v1476 = vld [vmem:[#allocation11 + $0x218] sm:$0xff]
    %v1477 = vld [vmem:[#allocation11 + $0x220] sm:$0xff]
    %v1478 = vld [vmem:[#allocation11 + $0x228] sm:$0xff]
    %v1479 = vld [vmem:[#allocation11 + $0x230] sm:$0xff]
    %v1480 = vld [vmem:[#allocation11 + $0x238] sm:$0xff]
    %v1481 = vld [vmem:[#allocation11 + $0x240] sm:$0xff]
    %v1482 = vld [vmem:[#allocation11 + $0x248] sm:$0xff]
    %v1483 = vld [vmem:[#allocation11 + $0x250] sm:$0xff]
    %v1484 = vld [vmem:[#allocation11 + $0x258] sm:$0xff]
    %v1485 = vld [vmem:[#allocation11 + $0x260] sm:$0xff]
    %v1486 = vld [vmem:[#allocation11 + $0x268] sm:$0xff]
    %v1487 = vld [vmem:[#allocation11 + $0x270] sm:$0xff]
    %v1488 = vld [vmem:[#allocation11 + $0x278] sm:$0xff]
    %v1489 = vld [vmem:[#allocation11 + $0x280] sm:$0xff]
    %v1490 = vld [vmem:[#allocation11 + $0x288] sm:$0xff]
    %v1491 = vld [vmem:[#allocation11 + $0x290] sm:$0xff]
    %v1492 = vld [vmem:[#allocation11 + $0x298] sm:$0xff]
    %v1493 = vld [vmem:[#allocation11 + $0x2a0] sm:$0xff]
    %v1494 = vld [vmem:[#allocation11 + $0x2a8] sm:$0xff]
    %v1495 = vld [vmem:[#allocation11 + $0x2b0] sm:$0xff]
    %v1496 = vld [vmem:[#allocation11 + $0x2b8] sm:$0xff]
    %v1497 = vld [vmem:[#allocation11 + $0x2c0] sm:$0xff]
    %v1498 = vld [vmem:[#allocation11 + $0x2c8] sm:$0xff]
    %v1499 = vld [vmem:[#allocation11 + $0x2d0] sm:$0xff]
    %v1500 = vld [vmem:[#allocation11 + $0x2d8] sm:$0xff]
    %v1501 = vld [vmem:[#allocation11 + $0x2e0] sm:$0xff]
    %v1502 = vld [vmem:[#allocation11 + $0x2e8] sm:$0xff]
    %v1503 = vld [vmem:[#allocation11 + $0x2f0] sm:$0xff]
    %v1504 = vld [vmem:[#allocation11 + $0x2f8] sm:$0xff]
    %v1505 = vld [vmem:[#allocation11 + $0x300] sm:$0xff]
    %v1506 = vld [vmem:[#allocation11 + $0x308] sm:$0xff]
    %v1507 = vld [vmem:[#allocation11 + $0x310] sm:$0xff]
    %v1508 = vld [vmem:[#allocation11 + $0x318] sm:$0xff]
    %v1509 = vld [vmem:[#allocation11 + $0x320] sm:$0xff]
    %v1510 = vld [vmem:[#allocation11 + $0x328] sm:$0xff]
    %v1511 = vld [vmem:[#allocation11 + $0x330] sm:$0xff]
    %v1512 = vld [vmem:[#allocation11 + $0x338] sm:$0xff]
    %v1513 = vld [vmem:[#allocation11 + $0x340] sm:$0xff]
    %v1514 = vld [vmem:[#allocation11 + $0x348] sm:$0xff]
    %v1515 = vld [vmem:[#allocation11 + $0x350] sm:$0xff]
    %v1516 = vld [vmem:[#allocation11 + $0x358] sm:$0xff]
    %v1517 = vld [vmem:[#allocation11 + $0x360] sm:$0xff]
    %v1518 = vld [vmem:[#allocation11 + $0x368] sm:$0xff]
    %v1519 = vld [vmem:[#allocation11 + $0x370] sm:$0xff]
    %v1520 = vld [vmem:[#allocation11 + $0x378] sm:$0xff]
    %v1521 = vld [vmem:[#allocation11 + $0x380] sm:$0xff]
    %v1522 = vld [vmem:[#allocation11 + $0x388] sm:$0xff]
    %v1523 = vld [vmem:[#allocation11 + $0x390] sm:$0xff]
    %v1524 = vld [vmem:[#allocation11 + $0x398] sm:$0xff]
    %v1525 = vld [vmem:[#allocation11 + $0x3a0] sm:$0xff]
    %v1526 = vld [vmem:[#allocation11 + $0x3a8] sm:$0xff]
    %v1527 = vld [vmem:[#allocation11 + $0x3b0] sm:$0xff]
    %v1528 = vld [vmem:[#allocation11 + $0x3b8] sm:$0xff]
    %v1529 = vld [vmem:[#allocation11 + $0x3c0] sm:$0xff]
    %v1530 = vld [vmem:[#allocation11 + $0x3c8] sm:$0xff]
    %v1531 = vld [vmem:[#allocation11 + $0x3d0] sm:$0xff]
    %v1532 = vld [vmem:[#allocation11 + $0x3d8] sm:$0xff]
    %v1533 = vld [vmem:[#allocation11 + $0x3e0] sm:$0xff]
    %v1534 = vld [vmem:[#allocation11 + $0x3e8] sm:$0xff]
    %v1535 = vld [vmem:[#allocation11 + $0x3f0] sm:$0xff]
    %v1536 = vld [vmem:[#allocation11 + $0x3f8] sm:$0xff]
    %v1537 = vld [vmem:[%s6] sm:$0xf]
    %v1539 = vperm.slane %v1537, 0
    %v1540 = vperm.slane %v1537, 1
    %v1541 = vperm.slane %v1537, 2
    %v1542 = vperm.slane %v1537, 3
    %v1675 = vunpack.c.l.b16 %v1409
    %v1676 = vunpack.c.h.b16 %v1409
    %v1677 = vunpack.c.l.b16 %v1410
    %v1678 = vunpack.c.h.b16 %v1410
    %v1679 = vunpack.c.l.b16 %v1411
    %v1680 = vunpack.c.h.b16 %v1411
    %v1681 = vunpack.c.l.b16 %v1412
    %v1682 = vunpack.c.h.b16 %v1412
    %v1683 = vunpack.c.l.b16 %v1413
    %v1684 = vunpack.c.h.b16 %v1413
    %v1685 = vunpack.c.l.b16 %v1414
    %v1686 = vunpack.c.h.b16 %v1414
    %v1687 = vunpack.c.l.b16 %v1415
    %v1688 = vunpack.c.h.b16 %v1415
    %v1689 = vunpack.c.l.b16 %v1416
    %v1690 = vunpack.c.h.b16 %v1416
    %v1691 = vunpack.c.l.b16 %v1417
    %v1692 = vunpack.c.h.b16 %v1417
    %v1693 = vunpack.c.l.b16 %v1418
    %v1694 = vunpack.c.h.b16 %v1418
    %v1695 = vunpack.c.l.b16 %v1419
    %v1696 = vunpack.c.h.b16 %v1419
    %v1697 = vunpack.c.l.b16 %v1420
    %v1698 = vunpack.c.h.b16 %v1420
    %v1699 = vunpack.c.l.b16 %v1421
    %v1700 = vunpack.c.h.b16 %v1421
    %v1701 = vunpack.c.l.b16 %v1422
    %v1702 = vunpack.c.h.b16 %v1422
    %v1703 = vunpack.c.l.b16 %v1423
    %v1704 = vunpack.c.h.b16 %v1423
    %v1705 = vunpack.c.l.b16 %v1424
    %v1706 = vunpack.c.h.b16 %v1424
    %v1707 = vunpack.c.l.b16 %v1425
    %v1708 = vunpack.c.h.b16 %v1425
    %v1709 = vunpack.c.l.b16 %v1426
    %v1710 = vunpack.c.h.b16 %v1426
    %v1711 = vunpack.c.l.b16 %v1427
    %v1712 = vunpack.c.h.b16 %v1427
    %v1713 = vunpack.c.l.b16 %v1428
    %v1714 = vunpack.c.h.b16 %v1428
    %v1715 = vunpack.c.l.b16 %v1429
    %v1716 = vunpack.c.h.b16 %v1429
    %v1717 = vunpack.c.l.b16 %v1430
    %v1718 = vunpack.c.h.b16 %v1430
    %v1719 = vunpack.c.l.b16 %v1431
    %v1720 = vunpack.c.h.b16 %v1431
    %v1721 = vunpack.c.l.b16 %v1432
    %v1722 = vunpack.c.h.b16 %v1432
    %v1723 = vunpack.c.l.b16 %v1433
    %v1724 = vunpack.c.h.b16 %v1433
    %v1725 = vunpack.c.l.b16 %v1434
    %v1726 = vunpack.c.h.b16 %v1434
    %v1727 = vunpack.c.l.b16 %v1435
    %v1728 = vunpack.c.h.b16 %v1435
    %v1729 = vunpack.c.l.b16 %v1436
    %v1730 = vunpack.c.h.b16 %v1436
    %v1731 = vunpack.c.l.b16 %v1437
    %v1732 = vunpack.c.h.b16 %v1437
    %v1733 = vunpack.c.l.b16 %v1438
    %v1734 = vunpack.c.h.b16 %v1438
    %v1735 = vunpack.c.l.b16 %v1439
    %v1736 = vunpack.c.h.b16 %v1439
    %v1737 = vunpack.c.l.b16 %v1440
    %v1738 = vunpack.c.h.b16 %v1440
    %v1739 = vunpack.c.l.b16 %v1441
    %v1740 = vunpack.c.h.b16 %v1441
    %v1741 = vunpack.c.l.b16 %v1442
    %v1742 = vunpack.c.h.b16 %v1442
    %v1743 = vunpack.c.l.b16 %v1443
    %v1744 = vunpack.c.h.b16 %v1443
    %v1745 = vunpack.c.l.b16 %v1444
    %v1746 = vunpack.c.h.b16 %v1444
    %v1747 = vunpack.c.l.b16 %v1445
    %v1748 = vunpack.c.h.b16 %v1445
    %v1749 = vunpack.c.l.b16 %v1446
    %v1750 = vunpack.c.h.b16 %v1446
    %v1751 = vunpack.c.l.b16 %v1447
    %v1752 = vunpack.c.h.b16 %v1447
    %v1753 = vunpack.c.l.b16 %v1448
    %v1754 = vunpack.c.h.b16 %v1448
    %v1755 = vunpack.c.l.b16 %v1449
    %v1756 = vunpack.c.h.b16 %v1449
    %v1757 = vunpack.c.l.b16 %v1450
    %v1758 = vunpack.c.h.b16 %v1450
    %v1759 = vunpack.c.l.b16 %v1451
    %v1760 = vunpack.c.h.b16 %v1451
    %v1761 = vunpack.c.l.b16 %v1452
    %v1762 = vunpack.c.h.b16 %v1452
    %v1763 = vunpack.c.l.b16 %v1453
    %v1764 = vunpack.c.h.b16 %v1453
    %v1765 = vunpack.c.l.b16 %v1454
    %v1766 = vunpack.c.h.b16 %v1454
    %v1767 = vunpack.c.l.b16 %v1455
    %v1768 = vunpack.c.h.b16 %v1455
    %v1769 = vunpack.c.l.b16 %v1456
    %v1770 = vunpack.c.h.b16 %v1456
    %v1771 = vunpack.c.l.b16 %v1457
    %v1772 = vunpack.c.h.b16 %v1457
    %v1773 = vunpack.c.l.b16 %v1458
    %v1774 = vunpack.c.h.b16 %v1458
    %v1775 = vunpack.c.l.b16 %v1459
    %v1776 = vunpack.c.h.b16 %v1459
    %v1777 = vunpack.c.l.b16 %v1460
    %v1778 = vunpack.c.h.b16 %v1460
    %v1779 = vunpack.c.l.b16 %v1461
    %v1780 = vunpack.c.h.b16 %v1461
    %v1781 = vunpack.c.l.b16 %v1462
    %v1782 = vunpack.c.h.b16 %v1462
    %v1783 = vunpack.c.l.b16 %v1463
    %v1784 = vunpack.c.h.b16 %v1463
    %v1785 = vunpack.c.l.b16 %v1464
    %v1786 = vunpack.c.h.b16 %v1464
    %v1787 = vunpack.c.l.b16 %v1465
    %v1788 = vunpack.c.h.b16 %v1465
    %v1789 = vunpack.c.l.b16 %v1466
    %v1790 = vunpack.c.h.b16 %v1466
    %v1791 = vunpack.c.l.b16 %v1467
    %v1792 = vunpack.c.h.b16 %v1467
    %v1793 = vunpack.c.l.b16 %v1468
    %v1794 = vunpack.c.h.b16 %v1468
    %v1795 = vunpack.c.l.b16 %v1469
    %v1796 = vunpack.c.h.b16 %v1469
    %v1797 = vunpack.c.l.b16 %v1470
    %v1798 = vunpack.c.h.b16 %v1470
    %v1799 = vunpack.c.l.b16 %v1471
    %v1800 = vunpack.c.h.b16 %v1471
    %v1801 = vunpack.c.l.b16 %v1472
    %v1802 = vunpack.c.h.b16 %v1472
    %v1803 = vunpack.c.l.b16 %v1473
    %v1804 = vunpack.c.h.b16 %v1473
    %v1805 = vunpack.c.l.b16 %v1474
    %v1806 = vunpack.c.h.b16 %v1474
    %v1807 = vunpack.c.l.b16 %v1475
    %v1808 = vunpack.c.h.b16 %v1475
    %v1809 = vunpack.c.l.b16 %v1476
    %v1810 = vunpack.c.h.b16 %v1476
    %v1811 = vunpack.c.l.b16 %v1477
    %v1812 = vunpack.c.h.b16 %v1477
    %v1813 = vunpack.c.l.b16 %v1478
    %v1814 = vunpack.c.h.b16 %v1478
    %v1815 = vunpack.c.l.b16 %v1479
    %v1816 = vunpack.c.h.b16 %v1479
    %v1817 = vunpack.c.l.b16 %v1480
    %v1818 = vunpack.c.h.b16 %v1480
    %v1819 = vunpack.c.l.b16 %v1481
    %v1820 = vunpack.c.h.b16 %v1481
    %v1821 = vunpack.c.l.b16 %v1482
    %v1822 = vunpack.c.h.b16 %v1482
    %v1823 = vunpack.c.l.b16 %v1483
    %v1824 = vunpack.c.h.b16 %v1483
    %v1825 = vunpack.c.l.b16 %v1484
    %v1826 = vunpack.c.h.b16 %v1484
    %v1827 = vunpack.c.l.b16 %v1485
    %v1828 = vunpack.c.h.b16 %v1485
    %v1829 = vunpack.c.l.b16 %v1486
    %v1830 = vunpack.c.h.b16 %v1486
    %v1831 = vunpack.c.l.b16 %v1487
    %v1832 = vunpack.c.h.b16 %v1487
    %v1833 = vunpack.c.l.b16 %v1488
    %v1834 = vunpack.c.h.b16 %v1488
    %v1835 = vunpack.c.l.b16 %v1489
    %v1836 = vunpack.c.h.b16 %v1489
    %v1837 = vunpack.c.l.b16 %v1490
    %v1838 = vunpack.c.h.b16 %v1490
    %v1839 = vunpack.c.l.b16 %v1491
    %v1840 = vunpack.c.h.b16 %v1491
    %v1841 = vunpack.c.l.b16 %v1492
    %v1842 = vunpack.c.h.b16 %v1492
    %v1843 = vunpack.c.l.b16 %v1493
    %v1844 = vunpack.c.h.b16 %v1493
    %v1845 = vunpack.c.l.b16 %v1494
    %v1846 = vunpack.c.h.b16 %v1494
    %v1847 = vunpack.c.l.b16 %v1495
    %v1848 = vunpack.c.h.b16 %v1495
    %v1849 = vunpack.c.l.b16 %v1496
    %v1850 = vunpack.c.h.b16 %v1496
    %v1851 = vunpack.c.l.b16 %v1497
    %v1852 = vunpack.c.h.b16 %v1497
    %v1853 = vunpack.c.l.b16 %v1498
    %v1854 = vunpack.c.h.b16 %v1498
    %v1855 = vunpack.c.l.b16 %v1499
    %v1856 = vunpack.c.h.b16 %v1499
    %v1857 = vunpack.c.l.b16 %v1500
    %v1858 = vunpack.c.h.b16 %v1500
    %v1859 = vunpack.c.l.b16 %v1501
    %v1860 = vunpack.c.h.b16 %v1501
    %v1861 = vunpack.c.l.b16 %v1502
    %v1862 = vunpack.c.h.b16 %v1502
    %v1863 = vunpack.c.l.b16 %v1503
    %v1864 = vunpack.c.h.b16 %v1503
    %v1865 = vunpack.c.l.b16 %v1504
    %v1866 = vunpack.c.h.b16 %v1504
    %v1867 = vunpack.c.l.b16 %v1505
    %v1868 = vunpack.c.h.b16 %v1505
    %v1869 = vunpack.c.l.b16 %v1506
    %v1870 = vunpack.c.h.b16 %v1506
    %v1871 = vunpack.c.l.b16 %v1507
    %v1872 = vunpack.c.h.b16 %v1507
    %v1873 = vunpack.c.l.b16 %v1508
    %v1874 = vunpack.c.h.b16 %v1508
    %v1875 = vunpack.c.l.b16 %v1509
    %v1876 = vunpack.c.h.b16 %v1509
    %v1877 = vunpack.c.l.b16 %v1510
    %v1878 = vunpack.c.h.b16 %v1510
    %v1879 = vunpack.c.l.b16 %v1511
    %v1880 = vunpack.c.h.b16 %v1511
    %v1881 = vunpack.c.l.b16 %v1512
    %v1882 = vunpack.c.h.b16 %v1512
    %v1883 = vunpack.c.l.b16 %v1513
    %v1884 = vunpack.c.h.b16 %v1513
    %v1885 = vunpack.c.l.b16 %v1514
    %v1886 = vunpack.c.h.b16 %v1514
    %v1887 = vunpack.c.l.b16 %v1515
    %v1888 = vunpack.c.h.b16 %v1515
    %v1889 = vunpack.c.l.b16 %v1516
    %v1890 = vunpack.c.h.b16 %v1516
    %v1891 = vunpack.c.l.b16 %v1517
    %v1892 = vunpack.c.h.b16 %v1517
    %v1893 = vunpack.c.l.b16 %v1518
    %v1894 = vunpack.c.h.b16 %v1518
    %v1895 = vunpack.c.l.b16 %v1519
    %v1896 = vunpack.c.h.b16 %v1519
    %v1897 = vunpack.c.l.b16 %v1520
    %v1898 = vunpack.c.h.b16 %v1520
    %v1899 = vunpack.c.l.b16 %v1521
    %v1900 = vunpack.c.h.b16 %v1521
    %v1901 = vunpack.c.l.b16 %v1522
    %v1902 = vunpack.c.h.b16 %v1522
    %v1903 = vunpack.c.l.b16 %v1523
    %v1904 = vunpack.c.h.b16 %v1523
    %v1905 = vunpack.c.l.b16 %v1524
    %v1906 = vunpack.c.h.b16 %v1524
    %v1907 = vunpack.c.l.b16 %v1525
    %v1908 = vunpack.c.h.b16 %v1525
    %v1909 = vunpack.c.l.b16 %v1526
    %v1910 = vunpack.c.h.b16 %v1526
    %v1911 = vunpack.c.l.b16 %v1527
    %v1912 = vunpack.c.h.b16 %v1527
    %v1913 = vunpack.c.l.b16 %v1528
    %v1914 = vunpack.c.h.b16 %v1528
    %v1915 = vunpack.c.l.b16 %v1529
    %v1916 = vunpack.c.h.b16 %v1529
    %v1917 = vunpack.c.l.b16 %v1530
    %v1918 = vunpack.c.h.b16 %v1530
    %v1919 = vunpack.c.l.b16 %v1531
    %v1920 = vunpack.c.h.b16 %v1531
    %v1921 = vunpack.c.l.b16 %v1532
    %v1922 = vunpack.c.h.b16 %v1532
    %v1923 = vunpack.c.l.b16 %v1533
    %v1924 = vunpack.c.h.b16 %v1533
    %v1925 = vunpack.c.l.b16 %v1534
    %v1926 = vunpack.c.h.b16 %v1534
    %v1927 = vunpack.c.l.b16 %v1535
    %v1928 = vunpack.c.h.b16 %v1535
    %v1929 = vunpack.c.l.b16 %v1536
    %v1930 = vunpack.c.h.b16 %v1536
    %v1931 = vpack.c.b16 %v1679, %v1675
    %v1932 = vpack.c.b16 %v1680, %v1676
    %v1933 = vpack.c.b16 %v1681, %v1677
    %v1934 = vpack.c.b16 %v1682, %v1678
    %v1935 = vpack.c.b16 %v1687, %v1683
    %v1936 = vpack.c.b16 %v1688, %v1684
    %v1937 = vpack.c.b16 %v1689, %v1685
    %v1938 = vpack.c.b16 %v1690, %v1686
    %v1939 = vpack.c.b16 %v1695, %v1691
    %v1940 = vpack.c.b16 %v1696, %v1692
    %v1941 = vpack.c.b16 %v1697, %v1693
    %v1942 = vpack.c.b16 %v1698, %v1694
    %v1943 = vpack.c.b16 %v1703, %v1699
    %v1944 = vpack.c.b16 %v1704, %v1700
    %v1945 = vpack.c.b16 %v1705, %v1701
    %v1946 = vpack.c.b16 %v1706, %v1702
    %v1947 = vpack.c.b16 %v1711, %v1707
    %v1948 = vpack.c.b16 %v1712, %v1708
    %v1949 = vpack.c.b16 %v1713, %v1709
    %v1950 = vpack.c.b16 %v1714, %v1710
    %v1951 = vpack.c.b16 %v1719, %v1715
    %v1952 = vpack.c.b16 %v1720, %v1716
    %v1953 = vpack.c.b16 %v1721, %v1717
    %v1954 = vpack.c.b16 %v1722, %v1718
    %v1955 = vpack.c.b16 %v1727, %v1723
    %v1956 = vpack.c.b16 %v1728, %v1724
    %v1957 = vpack.c.b16 %v1729, %v1725
    %v1958 = vpack.c.b16 %v1730, %v1726
    %v1959 = vpack.c.b16 %v1735, %v1731
    %v1960 = vpack.c.b16 %v1736, %v1732
    %v1961 = vpack.c.b16 %v1737, %v1733
    %v1962 = vpack.c.b16 %v1738, %v1734
    %v1963 = vpack.c.b16 %v1743, %v1739
    %v1964 = vpack.c.b16 %v1744, %v1740
    %v1965 = vpack.c.b16 %v1745, %v1741
    %v1966 = vpack.c.b16 %v1746, %v1742
    %v1967 = vpack.c.b16 %v1751, %v1747
    %v1968 = vpack.c.b16 %v1752, %v1748
    %v1969 = vpack.c.b16 %v1753, %v1749
    %v1970 = vpack.c.b16 %v1754, %v1750
    %v1971 = vpack.c.b16 %v1759, %v1755
    %v1972 = vpack.c.b16 %v1760, %v1756
    %v1973 = vpack.c.b16 %v1761, %v1757
    %v1974 = vpack.c.b16 %v1762, %v1758
    %v1975 = vpack.c.b16 %v1767, %v1763
    %v1976 = vpack.c.b16 %v1768, %v1764
    %v1977 = vpack.c.b16 %v1769, %v1765
    %v1978 = vpack.c.b16 %v1770, %v1766
    %v1979 = vpack.c.b16 %v1775, %v1771
    %v1980 = vpack.c.b16 %v1776, %v1772
    %v1981 = vpack.c.b16 %v1777, %v1773
    %v1982 = vpack.c.b16 %v1778, %v1774
    %v1983 = vpack.c.b16 %v1783, %v1779
    %v1984 = vpack.c.b16 %v1784, %v1780
    %v1985 = vpack.c.b16 %v1785, %v1781
    %v1986 = vpack.c.b16 %v1786, %v1782
    %v1987 = vpack.c.b16 %v1791, %v1787
    %v1988 = vpack.c.b16 %v1792, %v1788
    %v1989 = vpack.c.b16 %v1793, %v1789
    %v1990 = vpack.c.b16 %v1794, %v1790
    %v1991 = vpack.c.b16 %v1799, %v1795
    %v1992 = vpack.c.b16 %v1800, %v1796
    %v1993 = vpack.c.b16 %v1801, %v1797
    %v1994 = vpack.c.b16 %v1802, %v1798
    %v1995 = vpack.c.b16 %v1807, %v1803
    %v1996 = vpack.c.b16 %v1808, %v1804
    %v1997 = vpack.c.b16 %v1809, %v1805
    %v1998 = vpack.c.b16 %v1810, %v1806
    %v1999 = vpack.c.b16 %v1815, %v1811
    %v2000 = vpack.c.b16 %v1816, %v1812
    %v2001 = vpack.c.b16 %v1817, %v1813
    %v2002 = vpack.c.b16 %v1818, %v1814
    %v2003 = vpack.c.b16 %v1823, %v1819
    %v2004 = vpack.c.b16 %v1824, %v1820
    %v2005 = vpack.c.b16 %v1825, %v1821
    %v2006 = vpack.c.b16 %v1826, %v1822
    %v2007 = vpack.c.b16 %v1831, %v1827
    %v2008 = vpack.c.b16 %v1832, %v1828
    %v2009 = vpack.c.b16 %v1833, %v1829
    %v2010 = vpack.c.b16 %v1834, %v1830
    %v2011 = vpack.c.b16 %v1839, %v1835
    %v2012 = vpack.c.b16 %v1840, %v1836
    %v2013 = vpack.c.b16 %v1841, %v1837
    %v2014 = vpack.c.b16 %v1842, %v1838
    %v2015 = vpack.c.b16 %v1847, %v1843
    %v2016 = vpack.c.b16 %v1848, %v1844
    %v2017 = vpack.c.b16 %v1849, %v1845
    %v2018 = vpack.c.b16 %v1850, %v1846
    %v2019 = vpack.c.b16 %v1855, %v1851
    %v2020 = vpack.c.b16 %v1856, %v1852
    %v2021 = vpack.c.b16 %v1857, %v1853
    %v2022 = vpack.c.b16 %v1858, %v1854
    %v2023 = vpack.c.b16 %v1863, %v1859
    %v2024 = vpack.c.b16 %v1864, %v1860
    %v2025 = vpack.c.b16 %v1865, %v1861
    %v2026 = vpack.c.b16 %v1866, %v1862
    %v2027 = vpack.c.b16 %v1871, %v1867
    %v2028 = vpack.c.b16 %v1872, %v1868
    %v2029 = vpack.c.b16 %v1873, %v1869
    %v2030 = vpack.c.b16 %v1874, %v1870
    %v2031 = vpack.c.b16 %v1879, %v1875
    %v2032 = vpack.c.b16 %v1880, %v1876
    %v2033 = vpack.c.b16 %v1881, %v1877
    %v2034 = vpack.c.b16 %v1882, %v1878
    %v2035 = vpack.c.b16 %v1887, %v1883
    %v2036 = vpack.c.b16 %v1888, %v1884
    %v2037 = vpack.c.b16 %v1889, %v1885
    %v2038 = vpack.c.b16 %v1890, %v1886
    %v2039 = vpack.c.b16 %v1895, %v1891
    %v2040 = vpack.c.b16 %v1896, %v1892
    %v2041 = vpack.c.b16 %v1897, %v1893
    %v2042 = vpack.c.b16 %v1898, %v1894
    %v2043 = vpack.c.b16 %v1903, %v1899
    %v2044 = vpack.c.b16 %v1904, %v1900
    %v2045 = vpack.c.b16 %v1905, %v1901
    %v2046 = vpack.c.b16 %v1906, %v1902
    %v2047 = vpack.c.b16 %v1911, %v1907
    %v2048 = vpack.c.b16 %v1912, %v1908
    %v2049 = vpack.c.b16 %v1913, %v1909
    %v2050 = vpack.c.b16 %v1914, %v1910
    %v2051 = vpack.c.b16 %v1919, %v1915
    %v2052 = vpack.c.b16 %v1920, %v1916
    %v2053 = vpack.c.b16 %v1921, %v1917
    %v2054 = vpack.c.b16 %v1922, %v1918
    %v2055 = vpack.c.b16 %v1927, %v1923
    %v2056 = vpack.c.b16 %v1928, %v1924
    %v2057 = vpack.c.b16 %v1929, %v1925
    %v2058 = vpack.c.b16 %v1930, %v1926
    %2187 = vmatpush.bf16.msra.mxu0 %v1959
    %2188 = vmatpush.bf16.msra.mxu0 %v1955
    %2189 = vmatpush.bf16.msra.mxu0 %v1951
    %2190 = vmatpush.bf16.msra.mxu0 %v1947
    %2191 = vmatpush.bf16.msra.mxu0 %v1943
    %2192 = vmatpush.bf16.msra.mxu0 %v1939
    %2193 = vmatpush.bf16.msra.mxu0 %v1935
    %2194 = vmatpush.bf16.msra.mxu0 %v1931
    %2195 = vmatmul.bf16.gmra.mxu0 %v1405
    %v2196 = vpop.f32.mrf.mxu0
    %v2197 = vadd.f32 %v1539, %v2196
    %v2198 = vpop.f32.mrf.mxu0
    %2199 = vdwg.mxu0
    %2200 = vmatpush.bf16.msra.mxu0 %v1991
    %2201 = vmatpush.bf16.msra.mxu0 %v1987
    %2202 = vmatpush.bf16.msra.mxu0 %v1983
    %2203 = vmatpush.bf16.msra.mxu0 %v1979
    %2204 = vmatpush.bf16.msra.mxu0 %v1975
    %2205 = vmatpush.bf16.msra.mxu0 %v1971
    %2206 = vmatpush.bf16.msra.mxu0 %v1967
    %2207 = vmatpush.bf16.msra.mxu0 %v1963
    %2208 = vmatmul.bf16.gmra.mxu0 %v1406
    %v2209 = vpop.f32.mrf.mxu0
    %v2210 = vadd.f32 %v2197, %v2209
    %v2211 = vpop.f32.mrf.mxu0
    %2212 = vdwg.mxu0
    %2213 = vmatpush.bf16.msra.mxu0 %v2023
    %2214 = vmatpush.bf16.msra.mxu0 %v2019
    %2215 = vmatpush.bf16.msra.mxu0 %v2015
    %2216 = vmatpush.bf16.msra.mxu0 %v2011
    %2217 = vmatpush.bf16.msra.mxu0 %v2007
    %2218 = vmatpush.bf16.msra.mxu0 %v2003
    %2219 = vmatpush.bf16.msra.mxu0 %v1999
    %2220 = vmatpush.bf16.msra.mxu0 %v1995
    %2221 = vmatmul.bf16.gmra.mxu0 %v1407
    %v2222 = vpop.f32.mrf.mxu0
    %v2223 = vadd.f32 %v2210, %v2222
    %v2224 = vpop.f32.mrf.mxu0
    %2225 = vdwg.mxu0
    %2226 = vmatpush.bf16.msra.mxu0 %v2055
    %2227 = vmatpush.bf16.msra.mxu0 %v2051
    %2228 = vmatpush.bf16.msra.mxu0 %v2047
    %2229 = vmatpush.bf16.msra.mxu0 %v2043
    %2230 = vmatpush.bf16.msra.mxu0 %v2039
    %2231 = vmatpush.bf16.msra.mxu0 %v2035
    %2232 = vmatpush.bf16.msra.mxu0 %v2031
    %2233 = vmatpush.bf16.msra.mxu0 %v2027
    %2234 = vmatmul.bf16.gmra.mxu0 %v1408
    %v2235 = vpop.f32.mrf.mxu0
    %v2236 = vadd.f32 %v2223, %v2235
    %v2237 = vpop.f32.mrf.mxu0
    %2238 = vdwg.mxu0
    %2239 = vmatpush.bf16.msra.mxu0 %v1960
    %2240 = vmatpush.bf16.msra.mxu0 %v1956
    %2241 = vmatpush.bf16.msra.mxu0 %v1952
    %2242 = vmatpush.bf16.msra.mxu0 %v1948
    %2243 = vmatpush.bf16.msra.mxu0 %v1944
    %2244 = vmatpush.bf16.msra.mxu0 %v1940
    %2245 = vmatpush.bf16.msra.mxu0 %v1936
    %2246 = vmatpush.bf16.msra.mxu0 %v1932
    %2247 = vmatmul.bf16.gmra.mxu0 %v1405
    %v2248 = vpop.f32.mrf.mxu0
    %v2249 = vadd.f32 %v1540, %v2248
    %v2250 = vpop.f32.mrf.mxu0
    %2251 = vdwg.mxu0
    %2252 = vmatpush.bf16.msra.mxu0 %v1992
    %2253 = vmatpush.bf16.msra.mxu0 %v1988
    %2254 = vmatpush.bf16.msra.mxu0 %v1984
    %2255 = vmatpush.bf16.msra.mxu0 %v1980
    %2256 = vmatpush.bf16.msra.mxu0 %v1976
    %2257 = vmatpush.bf16.msra.mxu0 %v1972
    %2258 = vmatpush.bf16.msra.mxu0 %v1968
    %2259 = vmatpush.bf16.msra.mxu0 %v1964
    %2260 = vmatmul.bf16.gmra.mxu0 %v1406
    %v2261 = vpop.f32.mrf.mxu0
    %v2262 = vadd.f32 %v2249, %v2261
    %v2263 = vpop.f32.mrf.mxu0
    %2264 = vdwg.mxu0
    %2265 = vmatpush.bf16.msra.mxu0 %v2024
    %2266 = vmatpush.bf16.msra.mxu0 %v2020
    %2267 = vmatpush.bf16.msra.mxu0 %v2016
    %2268 = vmatpush.bf16.msra.mxu0 %v2012
    %2269 = vmatpush.bf16.msra.mxu0 %v2008
    %2270 = vmatpush.bf16.msra.mxu0 %v2004
    %2271 = vmatpush.bf16.msra.mxu0 %v2000
    %2272 = vmatpush.bf16.msra.mxu0 %v1996
    %2273 = vmatmul.bf16.gmra.mxu0 %v1407
    %v2274 = vpop.f32.mrf.mxu0
    %v2275 = vadd.f32 %v2262, %v2274
    %v2276 = vpop.f32.mrf.mxu0
    %2277 = vdwg.mxu0
    %2278 = vmatpush.bf16.msra.mxu0 %v2056
    %2279 = vmatpush.bf16.msra.mxu0 %v2052
    %2280 = vmatpush.bf16.msra.mxu0 %v2048
    %2281 = vmatpush.bf16.msra.mxu0 %v2044
    %2282 = vmatpush.bf16.msra.mxu0 %v2040
    %2283 = vmatpush.bf16.msra.mxu0 %v2036
    %2284 = vmatpush.bf16.msra.mxu0 %v2032
    %2285 = vmatpush.bf16.msra.mxu0 %v2028
    %2286 = vmatmul.bf16.gmra.mxu0 %v1408
    %v2287 = vpop.f32.mrf.mxu0
    %v2288 = vadd.f32 %v2275, %v2287
    %v2289 = vpop.f32.mrf.mxu0
    %2290 = vdwg.mxu0
    %2291 = vmatpush.bf16.msra.mxu0 %v1961
    %2292 = vmatpush.bf16.msra.mxu0 %v1957
    %2293 = vmatpush.bf16.msra.mxu0 %v1953
    %2294 = vmatpush.bf16.msra.mxu0 %v1949
    %2295 = vmatpush.bf16.msra.mxu0 %v1945
    %2296 = vmatpush.bf16.msra.mxu0 %v1941
    %2297 = vmatpush.bf16.msra.mxu0 %v1937
    %2298 = vmatpush.bf16.msra.mxu0 %v1933
    %2299 = vmatmul.bf16.gmra.mxu0 %v1405
    %v2300 = vpop.f32.mrf.mxu0
    %v2301 = vadd.f32 %v1541, %v2300
    %v2302 = vpop.f32.mrf.mxu0
    %2303 = vdwg.mxu0
    %2304 = vmatpush.bf16.msra.mxu0 %v1993
    %2305 = vmatpush.bf16.msra.mxu0 %v1989
    %2306 = vmatpush.bf16.msra.mxu0 %v1985
    %2307 = vmatpush.bf16.msra.mxu0 %v1981
    %2308 = vmatpush.bf16.msra.mxu0 %v1977
    %2309 = vmatpush.bf16.msra.mxu0 %v1973
    %2310 = vmatpush.bf16.msra.mxu0 %v1969
    %2311 = vmatpush.bf16.msra.mxu0 %v1965
    %2312 = vmatmul.bf16.gmra.mxu0 %v1406
    %v2313 = vpop.f32.mrf.mxu0
    %v2314 = vadd.f32 %v2301, %v2313
    %v2315 = vpop.f32.mrf.mxu0
    %2316 = vdwg.mxu0
    %2317 = vmatpush.bf16.msra.mxu0 %v2025
    %2318 = vmatpush.bf16.msra.mxu0 %v2021
    %2319 = vmatpush.bf16.msra.mxu0 %v2017
    %2320 = vmatpush.bf16.msra.mxu0 %v2013
    %2321 = vmatpush.bf16.msra.mxu0 %v2009
    %2322 = vmatpush.bf16.msra.mxu0 %v2005
    %2323 = vmatpush.bf16.msra.mxu0 %v2001
    %2324 = vmatpush.bf16.msra.mxu0 %v1997
    %2325 = vmatmul.bf16.gmra.mxu0 %v1407
    %v2326 = vpop.f32.mrf.mxu0
    %v2327 = vadd.f32 %v2314, %v2326
    %v2328 = vpop.f32.mrf.mxu0
    %2329 = vdwg.mxu0
    %2330 = vmatpush.bf16.msra.mxu0 %v2057
    %2331 = vmatpush.bf16.msra.mxu0 %v2053
    %2332 = vmatpush.bf16.msra.mxu0 %v2049
    %2333 = vmatpush.bf16.msra.mxu0 %v2045
    %2334 = vmatpush.bf16.msra.mxu0 %v2041
    %2335 = vmatpush.bf16.msra.mxu0 %v2037
    %2336 = vmatpush.bf16.msra.mxu0 %v2033
    %2337 = vmatpush.bf16.msra.mxu0 %v2029
    %2338 = vmatmul.bf16.gmra.mxu0 %v1408
    %v2339 = vpop.f32.mrf.mxu0
    %v2340 = vadd.f32 %v2327, %v2339
    %v2341 = vpop.f32.mrf.mxu0
    %2342 = vdwg.mxu0
    %2343 = vmatpush.bf16.msra.mxu0 %v1962
    %2344 = vmatpush.bf16.msra.mxu0 %v1958
    %2345 = vmatpush.bf16.msra.mxu0 %v1954
    %2346 = vmatpush.bf16.msra.mxu0 %v1950
    %2347 = vmatpush.bf16.msra.mxu0 %v1946
    %2348 = vmatpush.bf16.msra.mxu0 %v1942
    %2349 = vmatpush.bf16.msra.mxu0 %v1938
    %2350 = vmatpush.bf16.msra.mxu0 %v1934
    %2351 = vmatmul.bf16.gmra.mxu0 %v1405
    %v2352 = vpop.f32.mrf.mxu0
    %v2353 = vadd.f32 %v1542, %v2352
    %v2354 = vpop.f32.mrf.mxu0
    %2355 = vdwg.mxu0
    %2356 = vmatpush.bf16.msra.mxu0 %v1994
    %2357 = vmatpush.bf16.msra.mxu0 %v1990
    %2358 = vmatpush.bf16.msra.mxu0 %v1986
    %2359 = vmatpush.bf16.msra.mxu0 %v1982
    %2360 = vmatpush.bf16.msra.mxu0 %v1978
    %2361 = vmatpush.bf16.msra.mxu0 %v1974
    %2362 = vmatpush.bf16.msra.mxu0 %v1970
    %2363 = vmatpush.bf16.msra.mxu0 %v1966
    %2364 = vmatmul.bf16.gmra.mxu0 %v1406
    %v2365 = vpop.f32.mrf.mxu0
    %v2366 = vadd.f32 %v2353, %v2365
    %v2367 = vpop.f32.mrf.mxu0
    %2368 = vdwg.mxu0
    %2369 = vmatpush.bf16.msra.mxu0 %v2026
    %2370 = vmatpush.bf16.msra.mxu0 %v2022
    %2371 = vmatpush.bf16.msra.mxu0 %v2018
    %2372 = vmatpush.bf16.msra.mxu0 %v2014
    %2373 = vmatpush.bf16.msra.mxu0 %v2010
    %2374 = vmatpush.bf16.msra.mxu0 %v2006
    %2375 = vmatpush.bf16.msra.mxu0 %v2002
    %2376 = vmatpush.bf16.msra.mxu0 %v1998
    %2377 = vmatmul.bf16.gmra.mxu0 %v1407
    %v2378 = vpop.f32.mrf.mxu0
    %v2379 = vadd.f32 %v2366, %v2378
    %v2380 = vpop.f32.mrf.mxu0
    %2381 = vdwg.mxu0
    %2382 = vmatpush.bf16.msra.mxu0 %v2058
    %2383 = vmatpush.bf16.msra.mxu0 %v2054
    %2384 = vmatpush.bf16.msra.mxu0 %v2050
    %2385 = vmatpush.bf16.msra.mxu0 %v2046
    %2386 = vmatpush.bf16.msra.mxu0 %v2042
    %2387 = vmatpush.bf16.msra.mxu0 %v2038
    %2388 = vmatpush.bf16.msra.mxu0 %v2034
    %2389 = vmatpush.bf16.msra.mxu0 %v2030
    %2390 = vmatmul.bf16.gmra.mxu0 %v1408
    %v2391 = vpop.f32.mrf.mxu0
    %v2392 = vadd.f32 %v2379, %v2391
    %v2393 = vpop.f32.mrf.mxu0
    %2394 = vdwg.mxu0
    %vm2395 = vcmp.gt.f32.partialorder %v2236, 0.0
    %vm2396 = vcmp.gt.f32.partialorder %v2288, 0.0
    %vm2397 = vcmp.gt.f32.partialorder %v2340, 0.0
    %vm2398 = vcmp.gt.f32.partialorder %v2392, 0.0
    %v2399 = vmul.f32 %v2236, 0.01
    %v2400 = vmul.f32 %v2288, 0.01
    %v2401 = vmul.f32 %v2340, 0.01
    %v2402 = vmul.f32 %v2392, 0.01
    %v2403 = vsel %vm2395, %v2236, %v2399
    %v2404 = vsel %vm2396, %v2288, %v2400
    %v2405 = vsel %vm2397, %v2340, %v2401
    %v2406 = vsel %vm2398, %v2392, %v2402
    %v2407 = vpack.c.bf16 %v2403, %v2403
    %v2408 = vpack.c.bf16 %v2404, %v2404
    %v2409 = vpack.c.bf16 %v2405, %v2405
    %v2410 = vpack.c.bf16 %v2406, %v2406
    %v2411 = vld [vmem:[#allocation13] sm:$0xf]
    %v2412 = vld [vmem:[#allocation13 + $0x4] sm:$0xf]
    %v2413 = vld [vmem:[#allocation13 + $0x8] sm:$0xf]
    %v2414 = vld [vmem:[#allocation13 + $0xc] sm:$0xf]
    %v2415 = vld [vmem:[#allocation13 + $0x10] sm:$0xf]
    %v2416 = vld [vmem:[#allocation13 + $0x14] sm:$0xf]
    %v2417 = vld [vmem:[#allocation13 + $0x18] sm:$0xf]
    %v2418 = vld [vmem:[#allocation13 + $0x1c] sm:$0xf]
    %v2419 = vld [vmem:[#allocation13 + $0x20] sm:$0xf]
    %v2420 = vld [vmem:[#allocation13 + $0x24] sm:$0xf]
    %v2421 = vld [vmem:[#allocation13 + $0x28] sm:$0xf]
    %v2422 = vld [vmem:[#allocation13 + $0x2c] sm:$0xf]
    %v2423 = vld [vmem:[#allocation13 + $0x30] sm:$0xf]
    %v2424 = vld [vmem:[#allocation13 + $0x34] sm:$0xf]
    %v2425 = vld [vmem:[#allocation13 + $0x38] sm:$0xf]
    %v2426 = vld [vmem:[#allocation13 + $0x3c] sm:$0xf]
    %v2427 = vld [vmem:[#allocation13 + $0x40] sm:$0xf]
    %v2428 = vld [vmem:[#allocation13 + $0x44] sm:$0xf]
    %v2429 = vld [vmem:[#allocation13 + $0x48] sm:$0xf]
    %v2430 = vld [vmem:[#allocation13 + $0x4c] sm:$0xf]
    %v2431 = vld [vmem:[#allocation13 + $0x50] sm:$0xf]
    %v2432 = vld [vmem:[#allocation13 + $0x54] sm:$0xf]
    %v2433 = vld [vmem:[#allocation13 + $0x58] sm:$0xf]
    %v2434 = vld [vmem:[#allocation13 + $0x5c] sm:$0xf]
    %v2435 = vld [vmem:[#allocation13 + $0x60] sm:$0xf]
    %v2436 = vld [vmem:[#allocation13 + $0x64] sm:$0xf]
    %v2437 = vld [vmem:[#allocation13 + $0x68] sm:$0xf]
    %v2438 = vld [vmem:[#allocation13 + $0x6c] sm:$0xf]
    %v2439 = vld [vmem:[#allocation13 + $0x70] sm:$0xf]
    %v2440 = vld [vmem:[#allocation13 + $0x74] sm:$0xf]
    %v2441 = vld [vmem:[#allocation13 + $0x78] sm:$0xf]
    %v2442 = vld [vmem:[#allocation13 + $0x7c] sm:$0xf]
    %v2443 = vld [vmem:[#allocation13 + $0x80] sm:$0xf]
    %v2444 = vld [vmem:[#allocation13 + $0x84] sm:$0xf]
    %v2445 = vld [vmem:[#allocation13 + $0x88] sm:$0xf]
    %v2446 = vld [vmem:[#allocation13 + $0x8c] sm:$0xf]
    %v2447 = vld [vmem:[#allocation13 + $0x90] sm:$0xf]
    %v2448 = vld [vmem:[#allocation13 + $0x94] sm:$0xf]
    %v2449 = vld [vmem:[#allocation13 + $0x98] sm:$0xf]
    %v2450 = vld [vmem:[#allocation13 + $0x9c] sm:$0xf]
    %v2451 = vld [vmem:[#allocation13 + $0xa0] sm:$0xf]
    %v2452 = vld [vmem:[#allocation13 + $0xa4] sm:$0xf]
    %v2453 = vld [vmem:[#allocation13 + $0xa8] sm:$0xf]
    %v2454 = vld [vmem:[#allocation13 + $0xac] sm:$0xf]
    %v2455 = vld [vmem:[#allocation13 + $0xb0] sm:$0xf]
    %v2456 = vld [vmem:[#allocation13 + $0xb4] sm:$0xf]
    %v2457 = vld [vmem:[#allocation13 + $0xb8] sm:$0xf]
    %v2458 = vld [vmem:[#allocation13 + $0xbc] sm:$0xf]
    %v2459 = vld [vmem:[#allocation13 + $0xc0] sm:$0xf]
    %v2460 = vld [vmem:[#allocation13 + $0xc4] sm:$0xf]
    %v2461 = vld [vmem:[#allocation13 + $0xc8] sm:$0xf]
    %v2462 = vld [vmem:[#allocation13 + $0xcc] sm:$0xf]
    %v2463 = vld [vmem:[#allocation13 + $0xd0] sm:$0xf]
    %v2464 = vld [vmem:[#allocation13 + $0xd4] sm:$0xf]
    %v2465 = vld [vmem:[#allocation13 + $0xd8] sm:$0xf]
    %v2466 = vld [vmem:[#allocation13 + $0xdc] sm:$0xf]
    %v2467 = vld [vmem:[#allocation13 + $0xe0] sm:$0xf]
    %v2468 = vld [vmem:[#allocation13 + $0xe4] sm:$0xf]
    %v2469 = vld [vmem:[#allocation13 + $0xe8] sm:$0xf]
    %v2470 = vld [vmem:[#allocation13 + $0xec] sm:$0xf]
    %v2471 = vld [vmem:[#allocation13 + $0xf0] sm:$0xf]
    %v2472 = vld [vmem:[#allocation13 + $0xf4] sm:$0xf]
    %v2473 = vld [vmem:[#allocation13 + $0xf8] sm:$0xf]
    %v2474 = vld [vmem:[#allocation13 + $0xfc] sm:$0xf]
    %v2475 = vld [vmem:[%s8] sm:$0x1]
    %v2477 = vperm.slane %v2475, 0
    %v2543 = vunpack.c.l.b16 %v2411
    %v2544 = vunpack.c.l.b16 %v2412
    %v2545 = vunpack.c.l.b16 %v2413
    %v2546 = vunpack.c.l.b16 %v2414
    %v2547 = vunpack.c.l.b16 %v2415
    %v2548 = vunpack.c.l.b16 %v2416
    %v2549 = vunpack.c.l.b16 %v2417
    %v2550 = vunpack.c.l.b16 %v2418
    %v2551 = vunpack.c.l.b16 %v2419
    %v2552 = vunpack.c.l.b16 %v2420
    %v2553 = vunpack.c.l.b16 %v2421
    %v2554 = vunpack.c.l.b16 %v2422
    %v2555 = vunpack.c.l.b16 %v2423
    %v2556 = vunpack.c.l.b16 %v2424
    %v2557 = vunpack.c.l.b16 %v2425
    %v2558 = vunpack.c.l.b16 %v2426
    %v2559 = vunpack.c.l.b16 %v2427
    %v2560 = vunpack.c.l.b16 %v2428
    %v2561 = vunpack.c.l.b16 %v2429
    %v2562 = vunpack.c.l.b16 %v2430
    %v2563 = vunpack.c.l.b16 %v2431
    %v2564 = vunpack.c.l.b16 %v2432
    %v2565 = vunpack.c.l.b16 %v2433
    %v2566 = vunpack.c.l.b16 %v2434
    %v2567 = vunpack.c.l.b16 %v2435
    %v2568 = vunpack.c.l.b16 %v2436
    %v2569 = vunpack.c.l.b16 %v2437
    %v2570 = vunpack.c.l.b16 %v2438
    %v2571 = vunpack.c.l.b16 %v2439
    %v2572 = vunpack.c.l.b16 %v2440
    %v2573 = vunpack.c.l.b16 %v2441
    %v2574 = vunpack.c.l.b16 %v2442
    %v2575 = vunpack.c.l.b16 %v2443
    %v2576 = vunpack.c.l.b16 %v2444
    %v2577 = vunpack.c.l.b16 %v2445
    %v2578 = vunpack.c.l.b16 %v2446
    %v2579 = vunpack.c.l.b16 %v2447
    %v2580 = vunpack.c.l.b16 %v2448
    %v2581 = vunpack.c.l.b16 %v2449
    %v2582 = vunpack.c.l.b16 %v2450
    %v2583 = vunpack.c.l.b16 %v2451
    %v2584 = vunpack.c.l.b16 %v2452
    %v2585 = vunpack.c.l.b16 %v2453
    %v2586 = vunpack.c.l.b16 %v2454
    %v2587 = vunpack.c.l.b16 %v2455
    %v2588 = vunpack.c.l.b16 %v2456
    %v2589 = vunpack.c.l.b16 %v2457
    %v2590 = vunpack.c.l.b16 %v2458
    %v2591 = vunpack.c.l.b16 %v2459
    %v2592 = vunpack.c.l.b16 %v2460
    %v2593 = vunpack.c.l.b16 %v2461
    %v2594 = vunpack.c.l.b16 %v2462
    %v2595 = vunpack.c.l.b16 %v2463
    %v2596 = vunpack.c.l.b16 %v2464
    %v2597 = vunpack.c.l.b16 %v2465
    %v2598 = vunpack.c.l.b16 %v2466
    %v2599 = vunpack.c.l.b16 %v2467
    %v2600 = vunpack.c.l.b16 %v2468
    %v2601 = vunpack.c.l.b16 %v2469
    %v2602 = vunpack.c.l.b16 %v2470
    %v2603 = vunpack.c.l.b16 %v2471
    %v2604 = vunpack.c.l.b16 %v2472
    %v2605 = vunpack.c.l.b16 %v2473
    %v2606 = vunpack.c.l.b16 %v2474
    %v2607 = vpack.c.b16 %v2544, %v2543
    %v2608 = vpack.c.b16 %v2546, %v2545
    %v2609 = vpack.c.b16 %v2548, %v2547
    %v2610 = vpack.c.b16 %v2550, %v2549
    %v2611 = vpack.c.b16 %v2552, %v2551
    %v2612 = vpack.c.b16 %v2554, %v2553
    %v2613 = vpack.c.b16 %v2556, %v2555
    %v2614 = vpack.c.b16 %v2558, %v2557
    %v2615 = vpack.c.b16 %v2560, %v2559
    %v2616 = vpack.c.b16 %v2562, %v2561
    %v2617 = vpack.c.b16 %v2564, %v2563
    %v2618 = vpack.c.b16 %v2566, %v2565
    %v2619 = vpack.c.b16 %v2568, %v2567
    %v2620 = vpack.c.b16 %v2570, %v2569
    %v2621 = vpack.c.b16 %v2572, %v2571
    %v2622 = vpack.c.b16 %v2574, %v2573
    %v2623 = vpack.c.b16 %v2576, %v2575
    %v2624 = vpack.c.b16 %v2578, %v2577
    %v2625 = vpack.c.b16 %v2580, %v2579
    %v2626 = vpack.c.b16 %v2582, %v2581
    %v2627 = vpack.c.b16 %v2584, %v2583
    %v2628 = vpack.c.b16 %v2586, %v2585
    %v2629 = vpack.c.b16 %v2588, %v2587
    %v2630 = vpack.c.b16 %v2590, %v2589
    %v2631 = vpack.c.b16 %v2592, %v2591
    %v2632 = vpack.c.b16 %v2594, %v2593
    %v2633 = vpack.c.b16 %v2596, %v2595
    %v2634 = vpack.c.b16 %v2598, %v2597
    %v2635 = vpack.c.b16 %v2600, %v2599
    %v2636 = vpack.c.b16 %v2602, %v2601
    %v2637 = vpack.c.b16 %v2604, %v2603
    %v2638 = vpack.c.b16 %v2606, %v2605
    %2671 = vmatpush.bf16.msra.mxu0 %v2614
    %2672 = vmatpush.bf16.msra.mxu0 %v2613
    %2673 = vmatpush.bf16.msra.mxu0 %v2612
    %2674 = vmatpush.bf16.msra.mxu0 %v2611
    %2675 = vmatpush.bf16.msra.mxu0 %v2610
    %2676 = vmatpush.bf16.msra.mxu0 %v2609
    %2677 = vmatpush.bf16.msra.mxu0 %v2608
    %2678 = vmatpush.bf16.msra.mxu0 %v2607
    %2679 = vmatmul.bf16.gmra.mxu0 %v2407
    %v2680 = vpop.f32.mrf.mxu0
    %v2681 = vadd.f32 %v2477, %v2680
    %v2682 = vpop.f32.mrf.mxu0
    %2683 = vdwg.mxu0
    %2684 = vmatpush.bf16.msra.mxu0 %v2622
    %2685 = vmatpush.bf16.msra.mxu0 %v2621
    %2686 = vmatpush.bf16.msra.mxu0 %v2620
    %2687 = vmatpush.bf16.msra.mxu0 %v2619
    %2688 = vmatpush.bf16.msra.mxu0 %v2618
    %2689 = vmatpush.bf16.msra.mxu0 %v2617
    %2690 = vmatpush.bf16.msra.mxu0 %v2616
    %2691 = vmatpush.bf16.msra.mxu0 %v2615
    %2692 = vmatmul.bf16.gmra.mxu0 %v2408
    %v2693 = vpop.f32.mrf.mxu0
    %v2694 = vadd.f32 %v2681, %v2693
    %v2695 = vpop.f32.mrf.mxu0
    %2696 = vdwg.mxu0
    %2697 = vmatpush.bf16.msra.mxu0 %v2630
    %2698 = vmatpush.bf16.msra.mxu0 %v2629
    %2699 = vmatpush.bf16.msra.mxu0 %v2628
    %2700 = vmatpush.bf16.msra.mxu0 %v2627
    %2701 = vmatpush.bf16.msra.mxu0 %v2626
    %2702 = vmatpush.bf16.msra.mxu0 %v2625
    %2703 = vmatpush.bf16.msra.mxu0 %v2624
    %2704 = vmatpush.bf16.msra.mxu0 %v2623
    %2705 = vmatmul.bf16.gmra.mxu0 %v2409
    %v2706 = vpop.f32.mrf.mxu0
    %v2707 = vadd.f32 %v2694, %v2706
    %v2708 = vpop.f32.mrf.mxu0
    %2709 = vdwg.mxu0
    %2710 = vmatpush.bf16.msra.mxu0 %v2638
    %2711 = vmatpush.bf16.msra.mxu0 %v2637
    %2712 = vmatpush.bf16.msra.mxu0 %v2636
    %2713 = vmatpush.bf16.msra.mxu0 %v2635
    %2714 = vmatpush.bf16.msra.mxu0 %v2634
    %2715 = vmatpush.bf16.msra.mxu0 %v2633
    %2716 = vmatpush.bf16.msra.mxu0 %v2632
    %2717 = vmatpush.bf16.msra.mxu0 %v2631
    %2718 = vmatmul.bf16.gmra.mxu0 %v2410
    %v2719 = vpop.f32.mrf.mxu0
    %v2720 = vadd.f32 %v2707, %v2719
    %v2721 = vpop.f32.mrf.mxu0
    %2722 = vdwg.mxu0
    %2723 = vst [vmem:[#allocation14] sm:$0xff] %v2720
    // Predicated region
    $region66: #{tpu_custom_call.1} parent=1 // pred_check
      _
    $region67: #{tpu_custom_call.1} parent=1 // pred_check_branch
      %2725 = sbr.rel (0) target = $region69
    $region68: #{tpu_custom_call.1} parent=1 // pred_region
      %2727 = vsyncadd [#allocation4], 0
      %s2729 = sshll.u32 [#allocation14], 4
      %s2730 = int_to_ptr.vmem [resolvable:$true] %s2729
      %s2731 = sshll.u32 %s9, 4
      %s2732 = int_to_ptr.hbm [resolvable:$true] %s2731
      %2734 = dma.vmem_to_hbm [thread:$0]  %s2730, 128, %s2732, [#allocation4]
    $region69: #{tpu_custom_call.1} parent=1 // pred_fallthru
      _
    // Predicated region
    $region70: #{tpu_custom_call.1} parent=1 // pred_check
      _
    $region71: #{tpu_custom_call.1} parent=1 // pred_check_branch
      %2736 = sbr.rel (0) target = $region73
    $region72: #{tpu_custom_call.1} parent=1 // pred_region
      %2738 = dma.done [#allocation4], 128
    $region73: #{tpu_custom_call.1} parent=1 // pred_fallthru
      _
    %2739 = vsyncpa [#allocation3], 1
    %2740 = vsyncpa [#allocation6], 1
    %2741 = vsyncpa [#allocation9], 1
    %2742 = vsyncpa [#allocation12], 1
    %2743 = vsyncpa [#allocation4], 1

</llo_original>
